<compile_context>
chip_gen: v7x
topology: tpu7x:2x2x1
jax: 0.10.0
libtpu: 0.0.40
codegen_flags: <defaults>
</compile_context>

<pallas_src>
import functools

import jax
import jax.numpy as jnp
from jax import lax
from jax.experimental import pallas as pl
from jax.experimental.pallas import tpu as pltpu


# ----------------------------------------------------------------------------
# helpers
# ----------------------------------------------------------------------------
def _round_up(n, m):
    return ((n + m - 1) // m) * m


def _pad_gate_axis(w, h, h_pad):
    """Pad a packed (..., 4H) i|f|g|o gate axis gate-by-gate to (..., 4*h_pad)."""
    if h == h_pad:
        return w
    parts = jnp.split(w, 4, axis=-1)
    pad = [(0, 0)] * (w.ndim - 1) + [(0, h_pad - h)]
    return jnp.concatenate([jnp.pad(p, pad) for p in parts], axis=-1)


_VMEM_BUDGET = 24 * 2 ** 20       # working-set target (safe on v7x's 64 MiB)
_VMEM_LIMIT = 32 * 2 ** 20        # explicit scoped limit (also v5e-safe)


# ----------------------------------------------------------------------------
# Kernel 1: fully parallel matmul + bias  (vocab / logits projection)
# ----------------------------------------------------------------------------
def _matmul_bias_kernel(x_ref, w_ref, b_ref, o_ref):
    o_ref[...] = (jnp.dot(x_ref[...], w_ref[...],
                          preferred_element_type=jnp.float32)
                  + b_ref[...])


def _matmul_bias(x, w, b):
    """x:(M,K) @ w:(K,N) + b:(1,N) -> (M,N) f32.  bf16 inputs feed the MXU."""
    M, Kd = x.shape
    N = w.shape[1]
    xb, wb = x.dtype.itemsize, w.dtype.itemsize

    tn = 128
    for p in (512, 256, 128):
        if N % p == 0:
            tn = p
            break

    def vmem_use(tm_):
        # double-buffered x / w / b tiles + double-buffered f32 output tile
        return 2 * (tm_ * Kd * xb + Kd * tn * wb + tn * 4 + tm_ * tn * 4)

    tm = None
    for p in (2048, 1024, 512, 256, 128, 64, 32, 16, 8):
        if p <= M and M % p == 0 and vmem_use(p) <= _VMEM_BUDGET:
            tm = p
            break
    if tm is None:            # tiny / odd M (never hit with our padding)
        tm = M

    return pl.pallas_call(
        _matmul_bias_kernel,
        out_shape=jax.ShapeDtypeStruct((M, N), jnp.float32),
        grid_spec=pltpu.PrefetchScalarGridSpec(
            num_scalar_prefetch=0,
            grid=(M // tm, N // tn),
            in_specs=[pl.BlockSpec((tm, Kd), lambda i, j: (i, 0)),
                      pl.BlockSpec((Kd, tn), lambda i, j: (0, j)),
                      pl.BlockSpec((1, tn), lambda i, j: (0, j))],
            out_specs=pl.BlockSpec((tm, tn), lambda i, j: (i, j))),
        compiler_params=pltpu.CompilerParams(
            dimension_semantics=("parallel", "parallel"),
            vmem_limit_bytes=_VMEM_LIMIT),
    )(x, w, b)


# ----------------------------------------------------------------------------
# Kernel 2: sequential LSTM recurrence with fused input projection.
#   grid = (batch_blocks [parallel], time_blocks [arbitrary, innermost])
#   inputs : x (T_pad, B_pad, E) bf16          -> streamed (K, TB, E) blocks
#            W_ih (E, 4H_pad) bf16, W_hh (H_pad, 4H_pad) bf16,
#            bias (1, 4H_pad) f32              -> VMEM-resident
#   output : hs (T_pad, B_pad, H_pad) bf16
# ----------------------------------------------------------------------------
def _lstm_kernel(x_ref, wx_ref, whh_ref, b_ref, h_out_ref, h_scr, c_scr,
                 *, steps, hidden, unroll):
    # Reset recurrent state at the start of each batch block's time sweep.
    # Time is the innermost grid axis, so this is program_id(1).
    @pl.when(pl.program_id(1) == 0)
    def _():
        h_scr[...] = jnp.zeros_like(h_scr)
        c_scr[...] = jnp.zeros_like(c_scr)

    tb = h_scr.shape[0]
    h4 = 4 * hidden
    wx = wx_ref[...]                                   # (E, 4H)   bf16 resident
    whh = whh_ref[...]                                 # (H, 4H)   bf16 resident
    bias = jnp.broadcast_to(b_ref[...], (tb, h4))      # hoisted broadcast

    def body(k, carry):
        h, c = carry                                   # f32 (TB, H_pad)
        # Fused input projection (streams x, not gates_x) + recurrent matmul.
        gates = (jnp.dot(x_ref[k], wx, preferred_element_type=jnp.float32)
                 + jnp.dot(h.astype(whh.dtype), whh,
                           preferred_element_type=jnp.float32)
                 + bias)
        # PyTorch gate order along 4H: i, f, g, o.  hidden % 128 == 0 =>
        # every slice / elementwise op / store below is full-lane.
        i_g = jax.nn.sigmoid(gates[:, 0 * hidden:1 * hidden])
        f_g = jax.nn.sigmoid(gates[:, 1 * hidden:2 * hidden])
        g_g = jnp.tanh(gates[:, 2 * hidden:3 * hidden])
        o_g = jax.nn.sigmoid(gates[:, 3 * hidden:4 * hidden])
        c_new = f_g * c + i_g * g_g
        h_new = o_g * jnp.tanh(c_new)
        h_out_ref[k] = h_new.astype(h_out_ref.dtype)
        return h_new, c_new

    h_fin, c_fin = lax.fori_loop(0, steps, body, (h_scr[...], c_scr[...]),
                                 unroll=unroll)
    h_scr[...] = h_fin
    c_scr[...] = c_fin


def _choose_steps(T, TB, E, H_pad, budget=_VMEM_BUDGET):
    """Largest K (timesteps per grid step) whose working set fits the budget."""
    h4 = 4 * H_pad
    fixed = (2 * (E * h4 * 2 + H_pad * h4 * 2 + h4 * 4)   # resident weights/bias
             + 2 * TB * H_pad * 4)                        # h / c scratch
    per_k = 2 * TB * E * 2 + 2 * TB * H_pad * 2           # x in + hs out (bf16, 2-buf)
    cap = _round_up(T, 8)
    for cand in (256, 192, 128, 96, 64, 48, 32, 24, 16, 8):
        if cand <= cap and fixed + cand * per_k <= budget:
            return cand
    return min(cap, 8)


# ----------------------------------------------------------------------------
# Forward wrapper (matches LM_model.forward for model='LSTM' at inference)
# ----------------------------------------------------------------------------
def lm_model_forward(tokens, params):
    """tokens: (B, T) int32 -> logits (B, V, T)  (PyTorch .permute(0, 2, 1))."""
    emb_w = params["embedding"]          # (V, E), pad_index row zeroed
    w_ih_all = params["w_ih_all"]        # (E, 4H)
    w_hh_all = params["w_hh_all"]        # (H, 4H)
    b_all = params["b_all"]              # (1, 4H)  == b_ih + b_hh
    w_out = params["w_out"]              # (H, V)
    b_out = params["b_out"]              # (1, V)

    B, T = tokens.shape
    V, E = emb_w.shape
    H = w_hh_all.shape[0]

    # Pad hidden to a lane multiple: full-lane gate math and h stores.
    # Zero-padded weight/bias columns keep the padded lanes exactly zero.
    H_pad = _round_up(H, 128)
    wx = _pad_gate_axis(w_ih_all, H, H_pad).astype(jnp.bfloat16)     # (E, 4H_pad)
    whh = jnp.pad(_pad_gate_axis(w_hh_all, H, H_pad),
                  ((0, H_pad - H), (0, 0))).astype(jnp.bfloat16)     # (H_pad, 4H_pad)
    bias = _pad_gate_axis(b_all, H, H_pad).astype(jnp.float32)       # (1, 4H_pad)
    # TODO(synk): tile the 4H output dim of W_hh inside the recurrence for
    # very large H (H_pad >= ~2048) so the resident weight fits v7x's 64 MiB.

    # Batch layout: split into two parallel batch blocks (v7x megacore) when
    # the split stays bf16-tile aligned; otherwise one full-batch block.
    B_pad = _round_up(B, 8)
    if B_pad % 32 == 0:
        TB = B_pad // 2
    else:
        TB = B_pad

    K = _choose_steps(T, TB, E, H_pad)
    T_pad = _round_up(T, K)

    # Embedding gather (+ identity dropout) in bf16 glue -> time-major layout.
    x = jnp.take(emb_w.astype(jnp.bfloat16), tokens, axis=0)         # (B, T, E)
    x_t = jnp.transpose(x, (1, 0, 2))                                 # (T, B, E)
    x_t = jnp.pad(x_t, ((0, T_pad - T), (0, B_pad - B), (0, 0)))

    unroll = max(1, min(8, K))
    kernel = functools.partial(_lstm_kernel, steps=K, hidden=H_pad,
                               unroll=unroll)
    hs = pl.pallas_call(
        kernel,
        out_shape=jax.ShapeDtypeStruct((T_pad, B_pad, H_pad), jnp.bfloat16),
        grid_spec=pltpu.PrefetchScalarGridSpec(
            num_scalar_prefetch=0,
            grid=(B_pad // TB, T_pad // K),      # (parallel batch, serial time)
            in_specs=[pl.BlockSpec((K, TB, E), lambda b, t: (t, b, 0)),
                      pl.BlockSpec((E, 4 * H_pad), lambda b, t: (0, 0)),
                      pl.BlockSpec((H_pad, 4 * H_pad), lambda b, t: (0, 0)),
                      pl.BlockSpec((1, 4 * H_pad), lambda b, t: (0, 0))],
            out_specs=pl.BlockSpec((K, TB, H_pad), lambda b, t: (t, b, 0)),
            scratch_shapes=[pltpu.VMEM((TB, H_pad), jnp.float32),   # h state
                            pltpu.VMEM((TB, H_pad), jnp.float32)],  # c state
        ),
        compiler_params=pltpu.CompilerParams(
            dimension_semantics=("parallel", "arbitrary"),
            vmem_limit_bytes=_VMEM_LIMIT),
    )(x_t, wx, whh, bias)

    # Vocab projection, hoisted out of the recurrence.  V padded to 256 for
    # lane-dense stores and full MXU tiles; bf16 operands, f32 accumulate.
    V_pad = _round_up(V, 256)
    w_out_p = jnp.pad(w_out, ((0, H_pad - H), (0, V_pad - V))).astype(jnp.bfloat16)
    b_out_p = jnp.pad(b_out, ((0, 0), (0, V_pad - V))).astype(jnp.float32)
    logits = _matmul_bias(hs.reshape(T_pad * B_pad, H_pad), w_out_p, b_out_p)
    logits = logits.reshape(T_pad, B_pad, V_pad)[:T, :B, :V]          # (T, B, V)

    # (T, B, V) -> (B, V, T) == PyTorch .permute(0, 2, 1) on (B, T, V)
    return jnp.transpose(logits, (1, 2, 0))


# ----------------------------------------------------------------------------
# Deterministic parameter construction (torch-style shapes, then fused-packed)
# ----------------------------------------------------------------------------
def make_params(key, vocab, emb_dim, hidden, pad_index):
    ks = jax.random.split(key, 6)
    emb = jax.random.normal(ks[0], (vocab, emb_dim), jnp.float32) * 0.1
    emb = emb.at[pad_index].set(0.0)                      # padding_idx row = 0

    # torch layouts: weight_ih_l0 (4H, E), weight_hh_l0 (4H, H), biases (4H,)
    w_ih = jax.random.normal(ks[1], (4 * hidden, emb_dim), jnp.float32) * 0.1
    w_hh = jax.random.normal(ks[2], (4 * hidden, hidden), jnp.float32) * 0.1
    b_ih = jax.random.normal(ks[3], (4 * hidden,), jnp.float32) * 0.1
    b_hh = jax.random.normal(ks[4], (4 * hidden,), jnp.float32) * 0.1

    # nn.Linear(hidden, vocab): weight (V, H), bias (V,)
    w_lin = jax.random.normal(ks[5], (vocab, hidden), jnp.float32) * 0.1
    b_lin = jnp.zeros((vocab,), jnp.float32)

    params = {
        "embedding": emb,
        # fused, pre-transposed for "x @ W" form; gate order i,f,g,o along 4H
        "w_ih_all": w_ih.T,                                  # (E, 4H)
        "w_hh_all": w_hh.T,                                  # (H, 4H)
        "b_all": (b_ih + b_hh).reshape(1, 4 * hidden),       # (1, 4H)
        "w_out": w_lin.T,                                    # (H, V)
        "b_out": b_lin.reshape(1, -1),                       # (1, V)
    }
    torch_like = (emb, w_ih, w_hh, b_ih, b_hh, w_lin, b_lin)
    return params, torch_like


# ----------------------------------------------------------------------------
# Pure-JAX reference (mirrors the PyTorch forward exactly, f32 throughout)
# ----------------------------------------------------------------------------
def reference_forward(tokens, torch_like):
    emb, w_ih, w_hh, b_ih, b_hh, w_lin, b_lin = torch_like
    x = emb[tokens]                                   # (B, T, E)
    B, T, E = x.shape
    H = w_hh.shape[1]

    def step(carry, xt):
        h, c = carry
        gates = xt @ w_ih.T + h @ w_hh.T + b_ih + b_hh
        i, f, g, o = jnp.split(gates, 4, axis=-1)
        i = jax.nn.sigmoid(i); f = jax.nn.sigmoid(f)
        g = jnp.tanh(g);       o = jax.nn.sigmoid(o)
        c = f * c + i * g
        h = o * jnp.tanh(c)
        return (h, c), h

    init = (jnp.zeros((B, H), jnp.float32), jnp.zeros((B, H), jnp.float32))
    _, hs = jax.lax.scan(step, init, jnp.transpose(x, (1, 0, 2)))   # (T, B, H)
    out = hs @ w_lin.T + b_lin                                      # (T, B, V)
    return jnp.transpose(out, (1, 2, 0))                            # (B, V, T)


if __name__ == "__main__":
    B, T = 2, 8
    EMB, HID, VOCAB, PAD = 32, 32, 64, 0

    key = jax.random.PRNGKey(0)
    pkey, tkey = jax.random.split(key)
    params, torch_like = make_params(pkey, VOCAB, EMB, HID, PAD)
    tokens = jax.random.randint(tkey, (B, T), 0, VOCAB, dtype=jnp.int32)

    out = jax.block_until_ready(lm_model_forward(tokens, params))
    ref = jax.block_until_ready(reference_forward(tokens, torch_like))

    assert out.shape == (B, VOCAB, T), out.shape
    # bf16 MXU operands -> slightly looser tolerance than pure-f32.
    assert jnp.allclose(out, ref, atol=2e-2, rtol=2e-2), \
        float(jnp.abs(out - ref).max())
    print("KERNEL_OK")
</pallas_src>

<mosaic_0001>
module attributes {stable_mosaic.version = 11 : i64} {
  func.func @_lstm_kernel(%arg0: i32, %arg1: i32, %arg2: memref<8x8x32xbf16, #tpu.memory_space<vmem>>, %arg3: memref<32x512xbf16, #tpu.memory_space<vmem>>, %arg4: memref<128x512xbf16, #tpu.memory_space<vmem>>, %arg5: memref<1x512xf32, #tpu.memory_space<vmem>>, %arg6: memref<8x8x128xbf16, #tpu.memory_space<vmem>>, %arg7: memref<8x128xf32, #tpu.memory_space<vmem>>, %arg8: memref<8x128xf32, #tpu.memory_space<vmem>>) attributes {dimension_semantics = [#tpu.dimension_semantics<parallel>, #tpu.dimension_semantics<arbitrary>], iteration_bounds = array<i64: 1, 1>, scalar_prefetch = 0 : i64, scratch_operands = 2 : i64, tpu.core_type = #tpu.core_type<tc>, window_params = [{transform_indices = @transform_0, window_bounds = array<i64: 8, 8, 32>}, {pipeline_mode = #tpu.pipeline_mode<synchronous>, transform_indices = @transform_1, window_bounds = array<i64: 32, 512>}, {pipeline_mode = #tpu.pipeline_mode<synchronous>, transform_indices = @transform_2, window_bounds = array<i64: 128, 512>}, {pipeline_mode = #tpu.pipeline_mode<synchronous>, transform_indices = @transform_3, window_bounds = array<i64: 1, 512>}, {transform_indices = @transform_4, window_bounds = array<i64: 8, 8, 128>}]} {
    %c0_i32 = arith.constant 0 : i32
    %0 = arith.cmpi eq, %arg1, %c0_i32 : i32
    %1 = arith.extui %0 : i1 to i32
    %c0_i32_0 = arith.constant 0 : i32
    %2 = arith.cmpi ne, %1, %c0_i32_0 : i32
    scf.if %2 {
      %cst_86 = arith.constant 0.000000e+00 : f32
      %316 = vector.broadcast %cst_86 : f32 to vector<8x128xf32>
      %c0_87 = arith.constant 0 : index
      %c0_88 = arith.constant 0 : index
      %317 = vector.load %arg7[%c0_87, %c0_88] : memref<8x128xf32, #tpu.memory_space<vmem>>, vector<8x128xf32>
      tpu.vector_store %arg7[%c0_87, %c0_88], %316 {strides = array<i32>} : memref<8x128xf32, #tpu.memory_space<vmem>>, vector<8x128xf32>,
      %cst_89 = arith.constant 0.000000e+00 : f32
      %318 = vector.broadcast %cst_89 : f32 to vector<8x128xf32>
      %c0_90 = arith.constant 0 : index
      %c0_91 = arith.constant 0 : index
      %319 = vector.load %arg8[%c0_90, %c0_91] : memref<8x128xf32, #tpu.memory_space<vmem>>, vector<8x128xf32>
      tpu.vector_store %arg8[%c0_90, %c0_91], %318 {strides = array<i32>} : memref<8x128xf32, #tpu.memory_space<vmem>>, vector<8x128xf32>,
    } else {
    }
    %c0 = arith.constant 0 : index
    %c0_1 = arith.constant 0 : index
    %3 = vector.load %arg3[%c0, %c0_1] : memref<32x512xbf16, #tpu.memory_space<vmem>>, vector<32x512xbf16>
    %c0_2 = arith.constant 0 : index
    %c0_3 = arith.constant 0 : index
    %4 = vector.load %arg4[%c0_2, %c0_3] : memref<128x512xbf16, #tpu.memory_space<vmem>>, vector<128x512xbf16>
    %c0_4 = arith.constant 0 : index
    %c0_5 = arith.constant 0 : index
    %5 = vector.load %arg5[%c0_4, %c0_5] : memref<1x512xf32, #tpu.memory_space<vmem>>, vector<1x512xf32>
    %6 = vector.shape_cast %5 : vector<1x512xf32> to vector<1x512xf32>
    %7 = vector.broadcast %6 : vector<1x512xf32> to vector<8x512xf32>
    %c0_6 = arith.constant 0 : index
    %c0_7 = arith.constant 0 : index
    %8 = vector.load %arg7[%c0_6, %c0_7] : memref<8x128xf32, #tpu.memory_space<vmem>>, vector<8x128xf32>
    %c0_8 = arith.constant 0 : index
    %c0_9 = arith.constant 0 : index
    %9 = vector.load %arg8[%c0_8, %c0_9] : memref<8x128xf32, #tpu.memory_space<vmem>>, vector<8x128xf32>
    %c0_i32_10 = arith.constant 0 : i32
    %10 = arith.index_cast %c0_i32_10 : i32 to index
    %c0_11 = arith.constant 0 : index
    %c0_12 = arith.constant 0 : index
    %11 = vector.load %arg2[%10, %c0_11, %c0_12] : memref<8x8x32xbf16, #tpu.memory_space<vmem>>, vector<1x8x32xbf16>
    %12 = vector.shape_cast %11 : vector<1x8x32xbf16> to vector<8x32xbf16>
    %cst = arith.constant dense<0.000000e+00> : vector<8x512xf32>
    %13 = tpu.matmul %12, %3, %cst {dimension_numbers = #tpu.dot_dimension_numbers<[1], [0], [0], [1], [0, 0, 1, 1], [], []>} : vector<8x32xbf16>, vector<32x512xbf16>, vector<8x512xf32> -> vector<8x512xf32>
    %14 = arith.truncf %8 : vector<8x128xf32> to vector<8x128xbf16>
    %cst_13 = arith.constant dense<0.000000e+00> : vector<8x512xf32>
    %15 = tpu.matmul %14, %4, %cst_13 {dimension_numbers = #tpu.dot_dimension_numbers<[1], [0], [0], [1], [0, 0, 1, 1], [], []>} : vector<8x128xbf16>, vector<128x512xbf16>, vector<8x512xf32> -> vector<8x512xf32>
    %16 = arith.addf %13, %15 : vector<8x512xf32>
    %17 = arith.addf %16, %7 : vector<8x512xf32>
    %18 = vector.extract_strided_slice %17 {offsets = [0, 0], sizes = [8, 128], strides = [1, 1]} : vector<8x512xf32> to vector<8x128xf32>
    %19 = arith.negf %18 : vector<8x128xf32>
    %20 = math.exp %19 : vector<8x128xf32>
    %cst_14 = arith.constant 1.000000e+00 : f32
    %21 = vector.broadcast %cst_14 : f32 to vector<8x128xf32>
    %22 = arith.addf %21, %20 : vector<8x128xf32>
    %23 = arith.divf %21, %22 : vector<8x128xf32>
    %24 = vector.extract_strided_slice %17 {offsets = [0, 128], sizes = [8, 128], strides = [1, 1]} : vector<8x512xf32> to vector<8x128xf32>
    %25 = arith.negf %24 : vector<8x128xf32>
    %26 = math.exp %25 : vector<8x128xf32>
    %cst_15 = arith.constant 1.000000e+00 : f32
    %27 = vector.broadcast %cst_15 : f32 to vector<8x128xf32>
    %28 = arith.addf %27, %26 : vector<8x128xf32>
    %29 = arith.divf %27, %28 : vector<8x128xf32>
    %30 = vector.extract_strided_slice %17 {offsets = [0, 256], sizes = [8, 128], strides = [1, 1]} : vector<8x512xf32> to vector<8x128xf32>
    %31 = math.tanh %30 : vector<8x128xf32>
    %32 = vector.extract_strided_slice %17 {offsets = [0, 384], sizes = [8, 128], strides = [1, 1]} : vector<8x512xf32> to vector<8x128xf32>
    %33 = arith.negf %32 : vector<8x128xf32>
    %34 = math.exp %33 : vector<8x128xf32>
    %cst_16 = arith.constant 1.000000e+00 : f32
    %35 = vector.broadcast %cst_16 : f32 to vector<8x128xf32>
    %36 = arith.addf %35, %34 : vector<8x128xf32>
    %37 = arith.divf %35, %36 : vector<8x128xf32>
    %38 = arith.mulf %29, %9 : vector<8x128xf32>
    %39 = arith.mulf %23, %31 : vector<8x128xf32>
    %40 = arith.addf %38, %39 : vector<8x128xf32>
    %41 = math.tanh %40 : vector<8x128xf32>
    %42 = arith.mulf %37, %41 : vector<8x128xf32>
    %43 = arith.truncf %42 : vector<8x128xf32> to vector<8x128xbf16>
    %44 = arith.index_cast %c0_i32_10 : i32 to index
    %c0_17 = arith.constant 0 : index
    %c0_18 = arith.constant 0 : index
    %45 = vector.load %arg6[%44, %c0_17, %c0_18] : memref<8x8x128xbf16, #tpu.memory_space<vmem>>, vector<1x8x128xbf16>
    %46 = vector.shape_cast %45 : vector<1x8x128xbf16> to vector<8x128xbf16>
    %47 = vector.shape_cast %43 : vector<8x128xbf16> to vector<1x8x128xbf16>
    tpu.vector_store %arg6[%44, %c0_17, %c0_18], %47 {strides = array<i32>} : memref<8x8x128xbf16, #tpu.memory_space<vmem>>, vector<1x8x128xbf16>,
    %c1_i32 = arith.constant 1 : i32
    %48 = arith.index_cast %c1_i32 : i32 to index
    %c0_19 = arith.constant 0 : index
    %c0_20 = arith.constant 0 : index
    %49 = vector.load %arg2[%48, %c0_19, %c0_20] : memref<8x8x32xbf16, #tpu.memory_space<vmem>>, vector<1x8x32xbf16>
    %50 = vector.shape_cast %49 : vector<1x8x32xbf16> to vector<8x32xbf16>
    %cst_21 = arith.constant dense<0.000000e+00> : vector<8x512xf32>
    %51 = tpu.matmul %50, %3, %cst_21 {dimension_numbers = #tpu.dot_dimension_numbers<[1], [0], [0], [1], [0, 0, 1, 1], [], []>} : vector<8x32xbf16>, vector<32x512xbf16>, vector<8x512xf32> -> vector<8x512xf32>
    %52 = arith.truncf %42 : vector<8x128xf32> to vector<8x128xbf16>
    %cst_22 = arith.constant dense<0.000000e+00> : vector<8x512xf32>
    %53 = tpu.matmul %52, %4, %cst_22 {dimension_numbers = #tpu.dot_dimension_numbers<[1], [0], [0], [1], [0, 0, 1, 1], [], []>} : vector<8x128xbf16>, vector<128x512xbf16>, vector<8x512xf32> -> vector<8x512xf32>
    %54 = arith.addf %51, %53 : vector<8x512xf32>
    %55 = arith.addf %54, %7 : vector<8x512xf32>
    %56 = vector.extract_strided_slice %55 {offsets = [0, 0], sizes = [8, 128], strides = [1, 1]} : vector<8x512xf32> to vector<8x128xf32>
    %57 = arith.negf %56 : vector<8x128xf32>
    %58 = math.exp %57 : vector<8x128xf32>
    %cst_23 = arith.constant 1.000000e+00 : f32
    %59 = vector.broadcast %cst_23 : f32 to vector<8x128xf32>
    %60 = arith.addf %59, %58 : vector<8x128xf32>
    %61 = arith.divf %59, %60 : vector<8x128xf32>
    %62 = vector.extract_strided_slice %55 {offsets = [0, 128], sizes = [8, 128], strides = [1, 1]} : vector<8x512xf32> to vector<8x128xf32>
    %63 = arith.negf %62 : vector<8x128xf32>
    %64 = math.exp %63 : vector<8x128xf32>
    %cst_24 = arith.constant 1.000000e+00 : f32
    %65 = vector.broadcast %cst_24 : f32 to vector<8x128xf32>
    %66 = arith.addf %65, %64 : vector<8x128xf32>
    %67 = arith.divf %65, %66 : vector<8x128xf32>
    %68 = vector.extract_strided_slice %55 {offsets = [0, 256], sizes = [8, 128], strides = [1, 1]} : vector<8x512xf32> to vector<8x128xf32>
    %69 = math.tanh %68 : vector<8x128xf32>
    %70 = vector.extract_strided_slice %55 {offsets = [0, 384], sizes = [8, 128], strides = [1, 1]} : vector<8x512xf32> to vector<8x128xf32>
    %71 = arith.negf %70 : vector<8x128xf32>
    %72 = math.exp %71 : vector<8x128xf32>
    %cst_25 = arith.constant 1.000000e+00 : f32
    %73 = vector.broadcast %cst_25 : f32 to vector<8x128xf32>
    %74 = arith.addf %73, %72 : vector<8x128xf32>
    %75 = arith.divf %73, %74 : vector<8x128xf32>
    %76 = arith.mulf %67, %40 : vector<8x128xf32>
    %77 = arith.mulf %61, %69 : vector<8x128xf32>
    %78 = arith.addf %76, %77 : vector<8x128xf32>
    %79 = math.tanh %78 : vector<8x128xf32>
    %80 = arith.mulf %75, %79 : vector<8x128xf32>
    %81 = arith.truncf %80 : vector<8x128xf32> to vector<8x128xbf16>
    %82 = arith.index_cast %c1_i32 : i32 to index
    %c0_26 = arith.constant 0 : index
    %c0_27 = arith.constant 0 : index
    %83 = vector.load %arg6[%82, %c0_26, %c0_27] : memref<8x8x128xbf16, #tpu.memory_space<vmem>>, vector<1x8x128xbf16>
    %84 = vector.shape_cast %83 : vector<1x8x128xbf16> to vector<8x128xbf16>
    %85 = vector.shape_cast %81 : vector<8x128xbf16> to vector<1x8x128xbf16>
    tpu.vector_store %arg6[%82, %c0_26, %c0_27], %85 {strides = array<i32>} : memref<8x8x128xbf16, #tpu.memory_space<vmem>>, vector<1x8x128xbf16>,
    %c2_i32 = arith.constant 2 : i32
    %86 = arith.index_cast %c2_i32 : i32 to index
    %c0_28 = arith.constant 0 : index
    %c0_29 = arith.constant 0 : index
    %87 = vector.load %arg2[%86, %c0_28, %c0_29] : memref<8x8x32xbf16, #tpu.memory_space<vmem>>, vector<1x8x32xbf16>
    %88 = vector.shape_cast %87 : vector<1x8x32xbf16> to vector<8x32xbf16>
    %cst_30 = arith.constant dense<0.000000e+00> : vector<8x512xf32>
    %89 = tpu.matmul %88, %3, %cst_30 {dimension_numbers = #tpu.dot_dimension_numbers<[1], [0], [0], [1], [0, 0, 1, 1], [], []>} : vector<8x32xbf16>, vector<32x512xbf16>, vector<8x512xf32> -> vector<8x512xf32>
    %90 = arith.truncf %80 : vector<8x128xf32> to vector<8x128xbf16>
    %cst_31 = arith.constant dense<0.000000e+00> : vector<8x512xf32>
    %91 = tpu.matmul %90, %4, %cst_31 {dimension_numbers = #tpu.dot_dimension_numbers<[1], [0], [0], [1], [0, 0, 1, 1], [], []>} : vector<8x128xbf16>, vector<128x512xbf16>, vector<8x512xf32> -> vector<8x512xf32>
    %92 = arith.addf %89, %91 : vector<8x512xf32>
    %93 = arith.addf %92, %7 : vector<8x512xf32>
    %94 = vector.extract_strided_slice %93 {offsets = [0, 0], sizes = [8, 128], strides = [1, 1]} : vector<8x512xf32> to vector<8x128xf32>
    %95 = arith.negf %94 : vector<8x128xf32>
    %96 = math.exp %95 : vector<8x128xf32>
    %cst_32 = arith.constant 1.000000e+00 : f32
    %97 = vector.broadcast %cst_32 : f32 to vector<8x128xf32>
    %98 = arith.addf %97, %96 : vector<8x128xf32>
    %99 = arith.divf %97, %98 : vector<8x128xf32>
    %100 = vector.extract_strided_slice %93 {offsets = [0, 128], sizes = [8, 128], strides = [1, 1]} : vector<8x512xf32> to vector<8x128xf32>
    %101 = arith.negf %100 : vector<8x128xf32>
    %102 = math.exp %101 : vector<8x128xf32>
    %cst_33 = arith.constant 1.000000e+00 : f32
    %103 = vector.broadcast %cst_33 : f32 to vector<8x128xf32>
    %104 = arith.addf %103, %102 : vector<8x128xf32>
    %105 = arith.divf %103, %104 : vector<8x128xf32>
    %106 = vector.extract_strided_slice %93 {offsets = [0, 256], sizes = [8, 128], strides = [1, 1]} : vector<8x512xf32> to vector<8x128xf32>
    %107 = math.tanh %106 : vector<8x128xf32>
    %108 = vector.extract_strided_slice %93 {offsets = [0, 384], sizes = [8, 128], strides = [1, 1]} : vector<8x512xf32> to vector<8x128xf32>
    %109 = arith.negf %108 : vector<8x128xf32>
    %110 = math.exp %109 : vector<8x128xf32>
    %cst_34 = arith.constant 1.000000e+00 : f32
    %111 = vector.broadcast %cst_34 : f32 to vector<8x128xf32>
    %112 = arith.addf %111, %110 : vector<8x128xf32>
    %113 = arith.divf %111, %112 : vector<8x128xf32>
    %114 = arith.mulf %105, %78 : vector<8x128xf32>
    %115 = arith.mulf %99, %107 : vector<8x128xf32>
    %116 = arith.addf %114, %115 : vector<8x128xf32>
    %117 = math.tanh %116 : vector<8x128xf32>
    %118 = arith.mulf %113, %117 : vector<8x128xf32>
    %119 = arith.truncf %118 : vector<8x128xf32> to vector<8x128xbf16>
    %120 = arith.index_cast %c2_i32 : i32 to index
    %c0_35 = arith.constant 0 : index
    %c0_36 = arith.constant 0 : index
    %121 = vector.load %arg6[%120, %c0_35, %c0_36] : memref<8x8x128xbf16, #tpu.memory_space<vmem>>, vector<1x8x128xbf16>
    %122 = vector.shape_cast %121 : vector<1x8x128xbf16> to vector<8x128xbf16>
    %123 = vector.shape_cast %119 : vector<8x128xbf16> to vector<1x8x128xbf16>
    tpu.vector_store %arg6[%120, %c0_35, %c0_36], %123 {strides = array<i32>} : memref<8x8x128xbf16, #tpu.memory_space<vmem>>, vector<1x8x128xbf16>,
    %c3_i32 = arith.constant 3 : i32
    %124 = arith.index_cast %c3_i32 : i32 to index
    %c0_37 = arith.constant 0 : index
    %c0_38 = arith.constant 0 : index
    %125 = vector.load %arg2[%124, %c0_37, %c0_38] : memref<8x8x32xbf16, #tpu.memory_space<vmem>>, vector<1x8x32xbf16>
    %126 = vector.shape_cast %125 : vector<1x8x32xbf16> to vector<8x32xbf16>
    %cst_39 = arith.constant dense<0.000000e+00> : vector<8x512xf32>
    %127 = tpu.matmul %126, %3, %cst_39 {dimension_numbers = #tpu.dot_dimension_numbers<[1], [0], [0], [1], [0, 0, 1, 1], [], []>} : vector<8x32xbf16>, vector<32x512xbf16>, vector<8x512xf32> -> vector<8x512xf32>
    %128 = arith.truncf %118 : vector<8x128xf32> to vector<8x128xbf16>
    %cst_40 = arith.constant dense<0.000000e+00> : vector<8x512xf32>
    %129 = tpu.matmul %128, %4, %cst_40 {dimension_numbers = #tpu.dot_dimension_numbers<[1], [0], [0], [1], [0, 0, 1, 1], [], []>} : vector<8x128xbf16>, vector<128x512xbf16>, vector<8x512xf32> -> vector<8x512xf32>
    %130 = arith.addf %127, %129 : vector<8x512xf32>
    %131 = arith.addf %130, %7 : vector<8x512xf32>
    %132 = vector.extract_strided_slice %131 {offsets = [0, 0], sizes = [8, 128], strides = [1, 1]} : vector<8x512xf32> to vector<8x128xf32>
    %133 = arith.negf %132 : vector<8x128xf32>
    %134 = math.exp %133 : vector<8x128xf32>
    %cst_41 = arith.constant 1.000000e+00 : f32
    %135 = vector.broadcast %cst_41 : f32 to vector<8x128xf32>
    %136 = arith.addf %135, %134 : vector<8x128xf32>
    %137 = arith.divf %135, %136 : vector<8x128xf32>
    %138 = vector.extract_strided_slice %131 {offsets = [0, 128], sizes = [8, 128], strides = [1, 1]} : vector<8x512xf32> to vector<8x128xf32>
    %139 = arith.negf %138 : vector<8x128xf32>
    %140 = math.exp %139 : vector<8x128xf32>
    %cst_42 = arith.constant 1.000000e+00 : f32
    %141 = vector.broadcast %cst_42 : f32 to vector<8x128xf32>
    %142 = arith.addf %141, %140 : vector<8x128xf32>
    %143 = arith.divf %141, %142 : vector<8x128xf32>
    %144 = vector.extract_strided_slice %131 {offsets = [0, 256], sizes = [8, 128], strides = [1, 1]} : vector<8x512xf32> to vector<8x128xf32>
    %145 = math.tanh %144 : vector<8x128xf32>
    %146 = vector.extract_strided_slice %131 {offsets = [0, 384], sizes = [8, 128], strides = [1, 1]} : vector<8x512xf32> to vector<8x128xf32>
    %147 = arith.negf %146 : vector<8x128xf32>
    %148 = math.exp %147 : vector<8x128xf32>
    %cst_43 = arith.constant 1.000000e+00 : f32
    %149 = vector.broadcast %cst_43 : f32 to vector<8x128xf32>
    %150 = arith.addf %149, %148 : vector<8x128xf32>
    %151 = arith.divf %149, %150 : vector<8x128xf32>
    %152 = arith.mulf %143, %116 : vector<8x128xf32>
    %153 = arith.mulf %137, %145 : vector<8x128xf32>
    %154 = arith.addf %152, %153 : vector<8x128xf32>
    %155 = math.tanh %154 : vector<8x128xf32>
    %156 = arith.mulf %151, %155 : vector<8x128xf32>
    %157 = arith.truncf %156 : vector<8x128xf32> to vector<8x128xbf16>
    %158 = arith.index_cast %c3_i32 : i32 to index
    %c0_44 = arith.constant 0 : index
    %c0_45 = arith.constant 0 : index
    %159 = vector.load %arg6[%158, %c0_44, %c0_45] : memref<8x8x128xbf16, #tpu.memory_space<vmem>>, vector<1x8x128xbf16>
    %160 = vector.shape_cast %159 : vector<1x8x128xbf16> to vector<8x128xbf16>
    %161 = vector.shape_cast %157 : vector<8x128xbf16> to vector<1x8x128xbf16>
    tpu.vector_store %arg6[%158, %c0_44, %c0_45], %161 {strides = array<i32>} : memref<8x8x128xbf16, #tpu.memory_space<vmem>>, vector<1x8x128xbf16>,
    %c4_i32 = arith.constant 4 : i32
    %162 = arith.index_cast %c4_i32 : i32 to index
    %c0_46 = arith.constant 0 : index
    %c0_47 = arith.constant 0 : index
    %163 = vector.load %arg2[%162, %c0_46, %c0_47] : memref<8x8x32xbf16, #tpu.memory_space<vmem>>, vector<1x8x32xbf16>
    %164 = vector.shape_cast %163 : vector<1x8x32xbf16> to vector<8x32xbf16>
    %cst_48 = arith.constant dense<0.000000e+00> : vector<8x512xf32>
    %165 = tpu.matmul %164, %3, %cst_48 {dimension_numbers = #tpu.dot_dimension_numbers<[1], [0], [0], [1], [0, 0, 1, 1], [], []>} : vector<8x32xbf16>, vector<32x512xbf16>, vector<8x512xf32> -> vector<8x512xf32>
    %166 = arith.truncf %156 : vector<8x128xf32> to vector<8x128xbf16>
    %cst_49 = arith.constant dense<0.000000e+00> : vector<8x512xf32>
    %167 = tpu.matmul %166, %4, %cst_49 {dimension_numbers = #tpu.dot_dimension_numbers<[1], [0], [0], [1], [0, 0, 1, 1], [], []>} : vector<8x128xbf16>, vector<128x512xbf16>, vector<8x512xf32> -> vector<8x512xf32>
    %168 = arith.addf %165, %167 : vector<8x512xf32>
    %169 = arith.addf %168, %7 : vector<8x512xf32>
    %170 = vector.extract_strided_slice %169 {offsets = [0, 0], sizes = [8, 128], strides = [1, 1]} : vector<8x512xf32> to vector<8x128xf32>
    %171 = arith.negf %170 : vector<8x128xf32>
    %172 = math.exp %171 : vector<8x128xf32>
    %cst_50 = arith.constant 1.000000e+00 : f32
    %173 = vector.broadcast %cst_50 : f32 to vector<8x128xf32>
    %174 = arith.addf %173, %172 : vector<8x128xf32>
    %175 = arith.divf %173, %174 : vector<8x128xf32>
    %176 = vector.extract_strided_slice %169 {offsets = [0, 128], sizes = [8, 128], strides = [1, 1]} : vector<8x512xf32> to vector<8x128xf32>
    %177 = arith.negf %176 : vector<8x128xf32>
    %178 = math.exp %177 : vector<8x128xf32>
    %cst_51 = arith.constant 1.000000e+00 : f32
    %179 = vector.broadcast %cst_51 : f32 to vector<8x128xf32>
    %180 = arith.addf %179, %178 : vector<8x128xf32>
    %181 = arith.divf %179, %180 : vector<8x128xf32>
    %182 = vector.extract_strided_slice %169 {offsets = [0, 256], sizes = [8, 128], strides = [1, 1]} : vector<8x512xf32> to vector<8x128xf32>
    %183 = math.tanh %182 : vector<8x128xf32>
    %184 = vector.extract_strided_slice %169 {offsets = [0, 384], sizes = [8, 128], strides = [1, 1]} : vector<8x512xf32> to vector<8x128xf32>
    %185 = arith.negf %184 : vector<8x128xf32>
    %186 = math.exp %185 : vector<8x128xf32>
    %cst_52 = arith.constant 1.000000e+00 : f32
    %187 = vector.broadcast %cst_52 : f32 to vector<8x128xf32>
    %188 = arith.addf %187, %186 : vector<8x128xf32>
    %189 = arith.divf %187, %188 : vector<8x128xf32>
    %190 = arith.mulf %181, %154 : vector<8x128xf32>
    %191 = arith.mulf %175, %183 : vector<8x128xf32>
    %192 = arith.addf %190, %191 : vector<8x128xf32>
    %193 = math.tanh %192 : vector<8x128xf32>
    %194 = arith.mulf %189, %193 : vector<8x128xf32>
    %195 = arith.truncf %194 : vector<8x128xf32> to vector<8x128xbf16>
    %196 = arith.index_cast %c4_i32 : i32 to index
    %c0_53 = arith.constant 0 : index
    %c0_54 = arith.constant 0 : index
    %197 = vector.load %arg6[%196, %c0_53, %c0_54] : memref<8x8x128xbf16, #tpu.memory_space<vmem>>, vector<1x8x128xbf16>
    %198 = vector.shape_cast %197 : vector<1x8x128xbf16> to vector<8x128xbf16>
    %199 = vector.shape_cast %195 : vector<8x128xbf16> to vector<1x8x128xbf16>
    tpu.vector_store %arg6[%196, %c0_53, %c0_54], %199 {strides = array<i32>} : memref<8x8x128xbf16, #tpu.memory_space<vmem>>, vector<1x8x128xbf16>,
    %c5_i32 = arith.constant 5 : i32
    %200 = arith.index_cast %c5_i32 : i32 to index
    %c0_55 = arith.constant 0 : index
    %c0_56 = arith.constant 0 : index
    %201 = vector.load %arg2[%200, %c0_55, %c0_56] : memref<8x8x32xbf16, #tpu.memory_space<vmem>>, vector<1x8x32xbf16>
    %202 = vector.shape_cast %201 : vector<1x8x32xbf16> to vector<8x32xbf16>
    %cst_57 = arith.constant dense<0.000000e+00> : vector<8x512xf32>
    %203 = tpu.matmul %202, %3, %cst_57 {dimension_numbers = #tpu.dot_dimension_numbers<[1], [0], [0], [1], [0, 0, 1, 1], [], []>} : vector<8x32xbf16>, vector<32x512xbf16>, vector<8x512xf32> -> vector<8x512xf32>
    %204 = arith.truncf %194 : vector<8x128xf32> to vector<8x128xbf16>
    %cst_58 = arith.constant dense<0.000000e+00> : vector<8x512xf32>
    %205 = tpu.matmul %204, %4, %cst_58 {dimension_numbers = #tpu.dot_dimension_numbers<[1], [0], [0], [1], [0, 0, 1, 1], [], []>} : vector<8x128xbf16>, vector<128x512xbf16>, vector<8x512xf32> -> vector<8x512xf32>
    %206 = arith.addf %203, %205 : vector<8x512xf32>
    %207 = arith.addf %206, %7 : vector<8x512xf32>
    %208 = vector.extract_strided_slice %207 {offsets = [0, 0], sizes = [8, 128], strides = [1, 1]} : vector<8x512xf32> to vector<8x128xf32>
    %209 = arith.negf %208 : vector<8x128xf32>
    %210 = math.exp %209 : vector<8x128xf32>
    %cst_59 = arith.constant 1.000000e+00 : f32
    %211 = vector.broadcast %cst_59 : f32 to vector<8x128xf32>
    %212 = arith.addf %211, %210 : vector<8x128xf32>
    %213 = arith.divf %211, %212 : vector<8x128xf32>
    %214 = vector.extract_strided_slice %207 {offsets = [0, 128], sizes = [8, 128], strides = [1, 1]} : vector<8x512xf32> to vector<8x128xf32>
    %215 = arith.negf %214 : vector<8x128xf32>
    %216 = math.exp %215 : vector<8x128xf32>
    %cst_60 = arith.constant 1.000000e+00 : f32
    %217 = vector.broadcast %cst_60 : f32 to vector<8x128xf32>
    %218 = arith.addf %217, %216 : vector<8x128xf32>
    %219 = arith.divf %217, %218 : vector<8x128xf32>
    %220 = vector.extract_strided_slice %207 {offsets = [0, 256], sizes = [8, 128], strides = [1, 1]} : vector<8x512xf32> to vector<8x128xf32>
    %221 = math.tanh %220 : vector<8x128xf32>
    %222 = vector.extract_strided_slice %207 {offsets = [0, 384], sizes = [8, 128], strides = [1, 1]} : vector<8x512xf32> to vector<8x128xf32>
    %223 = arith.negf %222 : vector<8x128xf32>
    %224 = math.exp %223 : vector<8x128xf32>
    %cst_61 = arith.constant 1.000000e+00 : f32
    %225 = vector.broadcast %cst_61 : f32 to vector<8x128xf32>
    %226 = arith.addf %225, %224 : vector<8x128xf32>
    %227 = arith.divf %225, %226 : vector<8x128xf32>
    %228 = arith.mulf %219, %192 : vector<8x128xf32>
    %229 = arith.mulf %213, %221 : vector<8x128xf32>
    %230 = arith.addf %228, %229 : vector<8x128xf32>
    %231 = math.tanh %230 : vector<8x128xf32>
    %232 = arith.mulf %227, %231 : vector<8x128xf32>
    %233 = arith.truncf %232 : vector<8x128xf32> to vector<8x128xbf16>
    %234 = arith.index_cast %c5_i32 : i32 to index
    %c0_62 = arith.constant 0 : index
    %c0_63 = arith.constant 0 : index
    %235 = vector.load %arg6[%234, %c0_62, %c0_63] : memref<8x8x128xbf16, #tpu.memory_space<vmem>>, vector<1x8x128xbf16>
    %236 = vector.shape_cast %235 : vector<1x8x128xbf16> to vector<8x128xbf16>
    %237 = vector.shape_cast %233 : vector<8x128xbf16> to vector<1x8x128xbf16>
    tpu.vector_store %arg6[%234, %c0_62, %c0_63], %237 {strides = array<i32>} : memref<8x8x128xbf16, #tpu.memory_space<vmem>>, vector<1x8x128xbf16>,
    %c6_i32 = arith.constant 6 : i32
    %238 = arith.index_cast %c6_i32 : i32 to index
    %c0_64 = arith.constant 0 : index
    %c0_65 = arith.constant 0 : index
    %239 = vector.load %arg2[%238, %c0_64, %c0_65] : memref<8x8x32xbf16, #tpu.memory_space<vmem>>, vector<1x8x32xbf16>
    %240 = vector.shape_cast %239 : vector<1x8x32xbf16> to vector<8x32xbf16>
    %cst_66 = arith.constant dense<0.000000e+00> : vector<8x512xf32>
    %241 = tpu.matmul %240, %3, %cst_66 {dimension_numbers = #tpu.dot_dimension_numbers<[1], [0], [0], [1], [0, 0, 1, 1], [], []>} : vector<8x32xbf16>, vector<32x512xbf16>, vector<8x512xf32> -> vector<8x512xf32>
    %242 = arith.truncf %232 : vector<8x128xf32> to vector<8x128xbf16>
    %cst_67 = arith.constant dense<0.000000e+00> : vector<8x512xf32>
    %243 = tpu.matmul %242, %4, %cst_67 {dimension_numbers = #tpu.dot_dimension_numbers<[1], [0], [0], [1], [0, 0, 1, 1], [], []>} : vector<8x128xbf16>, vector<128x512xbf16>, vector<8x512xf32> -> vector<8x512xf32>
    %244 = arith.addf %241, %243 : vector<8x512xf32>
    %245 = arith.addf %244, %7 : vector<8x512xf32>
    %246 = vector.extract_strided_slice %245 {offsets = [0, 0], sizes = [8, 128], strides = [1, 1]} : vector<8x512xf32> to vector<8x128xf32>
    %247 = arith.negf %246 : vector<8x128xf32>
    %248 = math.exp %247 : vector<8x128xf32>
    %cst_68 = arith.constant 1.000000e+00 : f32
    %249 = vector.broadcast %cst_68 : f32 to vector<8x128xf32>
    %250 = arith.addf %249, %248 : vector<8x128xf32>
    %251 = arith.divf %249, %250 : vector<8x128xf32>
    %252 = vector.extract_strided_slice %245 {offsets = [0, 128], sizes = [8, 128], strides = [1, 1]} : vector<8x512xf32> to vector<8x128xf32>
    %253 = arith.negf %252 : vector<8x128xf32>
    %254 = math.exp %253 : vector<8x128xf32>
    %cst_69 = arith.constant 1.000000e+00 : f32
    %255 = vector.broadcast %cst_69 : f32 to vector<8x128xf32>
    %256 = arith.addf %255, %254 : vector<8x128xf32>
    %257 = arith.divf %255, %256 : vector<8x128xf32>
    %258 = vector.extract_strided_slice %245 {offsets = [0, 256], sizes = [8, 128], strides = [1, 1]} : vector<8x512xf32> to vector<8x128xf32>
    %259 = math.tanh %258 : vector<8x128xf32>
    %260 = vector.extract_strided_slice %245 {offsets = [0, 384], sizes = [8, 128], strides = [1, 1]} : vector<8x512xf32> to vector<8x128xf32>
    %261 = arith.negf %260 : vector<8x128xf32>
    %262 = math.exp %261 : vector<8x128xf32>
    %cst_70 = arith.constant 1.000000e+00 : f32
    %263 = vector.broadcast %cst_70 : f32 to vector<8x128xf32>
    %264 = arith.addf %263, %262 : vector<8x128xf32>
    %265 = arith.divf %263, %264 : vector<8x128xf32>
    %266 = arith.mulf %257, %230 : vector<8x128xf32>
    %267 = arith.mulf %251, %259 : vector<8x128xf32>
    %268 = arith.addf %266, %267 : vector<8x128xf32>
    %269 = math.tanh %268 : vector<8x128xf32>
    %270 = arith.mulf %265, %269 : vector<8x128xf32>
    %271 = arith.truncf %270 : vector<8x128xf32> to vector<8x128xbf16>
    %272 = arith.index_cast %c6_i32 : i32 to index
    %c0_71 = arith.constant 0 : index
    %c0_72 = arith.constant 0 : index
    %273 = vector.load %arg6[%272, %c0_71, %c0_72] : memref<8x8x128xbf16, #tpu.memory_space<vmem>>, vector<1x8x128xbf16>
    %274 = vector.shape_cast %273 : vector<1x8x128xbf16> to vector<8x128xbf16>
    %275 = vector.shape_cast %271 : vector<8x128xbf16> to vector<1x8x128xbf16>
    tpu.vector_store %arg6[%272, %c0_71, %c0_72], %275 {strides = array<i32>} : memref<8x8x128xbf16, #tpu.memory_space<vmem>>, vector<1x8x128xbf16>,
    %c7_i32 = arith.constant 7 : i32
    %276 = arith.index_cast %c7_i32 : i32 to index
    %c0_73 = arith.constant 0 : index
    %c0_74 = arith.constant 0 : index
    %277 = vector.load %arg2[%276, %c0_73, %c0_74] : memref<8x8x32xbf16, #tpu.memory_space<vmem>>, vector<1x8x32xbf16>
    %278 = vector.shape_cast %277 : vector<1x8x32xbf16> to vector<8x32xbf16>
    %cst_75 = arith.constant dense<0.000000e+00> : vector<8x512xf32>
    %279 = tpu.matmul %278, %3, %cst_75 {dimension_numbers = #tpu.dot_dimension_numbers<[1], [0], [0], [1], [0, 0, 1, 1], [], []>} : vector<8x32xbf16>, vector<32x512xbf16>, vector<8x512xf32> -> vector<8x512xf32>
    %280 = arith.truncf %270 : vector<8x128xf32> to vector<8x128xbf16>
    %cst_76 = arith.constant dense<0.000000e+00> : vector<8x512xf32>
    %281 = tpu.matmul %280, %4, %cst_76 {dimension_numbers = #tpu.dot_dimension_numbers<[1], [0], [0], [1], [0, 0, 1, 1], [], []>} : vector<8x128xbf16>, vector<128x512xbf16>, vector<8x512xf32> -> vector<8x512xf32>
    %282 = arith.addf %279, %281 : vector<8x512xf32>
    %283 = arith.addf %282, %7 : vector<8x512xf32>
    %284 = vector.extract_strided_slice %283 {offsets = [0, 0], sizes = [8, 128], strides = [1, 1]} : vector<8x512xf32> to vector<8x128xf32>
    %285 = arith.negf %284 : vector<8x128xf32>
    %286 = math.exp %285 : vector<8x128xf32>
    %cst_77 = arith.constant 1.000000e+00 : f32
    %287 = vector.broadcast %cst_77 : f32 to vector<8x128xf32>
    %288 = arith.addf %287, %286 : vector<8x128xf32>
    %289 = arith.divf %287, %288 : vector<8x128xf32>
    %290 = vector.extract_strided_slice %283 {offsets = [0, 128], sizes = [8, 128], strides = [1, 1]} : vector<8x512xf32> to vector<8x128xf32>
    %291 = arith.negf %290 : vector<8x128xf32>
    %292 = math.exp %291 : vector<8x128xf32>
    %cst_78 = arith.constant 1.000000e+00 : f32
    %293 = vector.broadcast %cst_78 : f32 to vector<8x128xf32>
    %294 = arith.addf %293, %292 : vector<8x128xf32>
    %295 = arith.divf %293, %294 : vector<8x128xf32>
    %296 = vector.extract_strided_slice %283 {offsets = [0, 256], sizes = [8, 128], strides = [1, 1]} : vector<8x512xf32> to vector<8x128xf32>
    %297 = math.tanh %296 : vector<8x128xf32>
    %298 = vector.extract_strided_slice %283 {offsets = [0, 384], sizes = [8, 128], strides = [1, 1]} : vector<8x512xf32> to vector<8x128xf32>
    %299 = arith.negf %298 : vector<8x128xf32>
    %300 = math.exp %299 : vector<8x128xf32>
    %cst_79 = arith.constant 1.000000e+00 : f32
    %301 = vector.broadcast %cst_79 : f32 to vector<8x128xf32>
    %302 = arith.addf %301, %300 : vector<8x128xf32>
    %303 = arith.divf %301, %302 : vector<8x128xf32>
    %304 = arith.mulf %295, %268 : vector<8x128xf32>
    %305 = arith.mulf %289, %297 : vector<8x128xf32>
    %306 = arith.addf %304, %305 : vector<8x128xf32>
    %307 = math.tanh %306 : vector<8x128xf32>
    %308 = arith.mulf %303, %307 : vector<8x128xf32>
    %309 = arith.truncf %308 : vector<8x128xf32> to vector<8x128xbf16>
    %310 = arith.index_cast %c7_i32 : i32 to index
    %c0_80 = arith.constant 0 : index
    %c0_81 = arith.constant 0 : index
    %311 = vector.load %arg6[%310, %c0_80, %c0_81] : memref<8x8x128xbf16, #tpu.memory_space<vmem>>, vector<1x8x128xbf16>
    %312 = vector.shape_cast %311 : vector<1x8x128xbf16> to vector<8x128xbf16>
    %313 = vector.shape_cast %309 : vector<8x128xbf16> to vector<1x8x128xbf16>
    tpu.vector_store %arg6[%310, %c0_80, %c0_81], %313 {strides = array<i32>} : memref<8x8x128xbf16, #tpu.memory_space<vmem>>, vector<1x8x128xbf16>,
    %c8_i32 = arith.constant 8 : i32
    %c0_82 = arith.constant 0 : index
    %c0_83 = arith.constant 0 : index
    %314 = vector.load %arg7[%c0_82, %c0_83] : memref<8x128xf32, #tpu.memory_space<vmem>>, vector<8x128xf32>
    tpu.vector_store %arg7[%c0_82, %c0_83], %308 {strides = array<i32>} : memref<8x128xf32, #tpu.memory_space<vmem>>, vector<8x128xf32>,
    %c0_84 = arith.constant 0 : index
    %c0_85 = arith.constant 0 : index
    %315 = vector.load %arg8[%c0_84, %c0_85] : memref<8x128xf32, #tpu.memory_space<vmem>>, vector<8x128xf32>
    tpu.vector_store %arg8[%c0_84, %c0_85], %306 {strides = array<i32>} : memref<8x128xf32, #tpu.memory_space<vmem>>, vector<8x128xf32>,
    return
  }
  func.func @transform_0(%arg0: i32, %arg1: i32) -> (i32, i32, i32) {
    %c0_i32 = arith.constant 0 : i32
    %c0_i32_0 = arith.constant 0 : i32
    return %arg1, %arg0, %c0_i32 : i32, i32, i32
  }
  func.func @transform_1(%arg0: i32, %arg1: i32) -> (i32, i32) {
    %c0_i32 = arith.constant 0 : i32
    %c0_i32_0 = arith.constant 0 : i32
    %c0_i32_1 = arith.constant 0 : i32
    return %c0_i32, %c0_i32_0 : i32, i32
  }
  func.func @transform_2(%arg0: i32, %arg1: i32) -> (i32, i32) {
    %c0_i32 = arith.constant 0 : i32
    %c0_i32_0 = arith.constant 0 : i32
    %c0_i32_1 = arith.constant 0 : i32
    return %c0_i32, %c0_i32_0 : i32, i32
  }
  func.func @transform_3(%arg0: i32, %arg1: i32) -> (i32, i32) {
    %c0_i32 = arith.constant 0 : i32
    %c0_i32_0 = arith.constant 0 : i32
    %c0_i32_1 = arith.constant 0 : i32
    return %c0_i32, %c0_i32_0 : i32, i32
  }
  func.func @transform_4(%arg0: i32, %arg1: i32) -> (i32, i32, i32) {
    %c0_i32 = arith.constant 0 : i32
    %c0_i32_0 = arith.constant 0 : i32
    return %arg1, %arg0, %c0_i32 : i32, i32, i32
  }
}

</mosaic_0001>

<llo_original>
// kernel: tpu_custom_call.1
$region0: #{tpu_custom_call.1}
  #allocation0 [shape = 'u32[]', space=smem, size = 0x4, offset = 0x4, fixed_abs, tag = 'smem constant byte address 0x4 - core index']
  #allocation1 [shape = 'u32[144,128]{1,0:T(1,128)}', space=vmem, size = 0x12000, scoped, tag = 'internal scratch']
  #allocation2 [shape = 'f32[8,128]{1,0:T(8,128)}', space=vmem, size = 0x1000, scoped, tag = 'scratch operand']
  #allocation3 [shape = 'f32[8,128]{1,0:T(8,128)}', space=vmem, size = 0x1000, scoped, tag = 'scratch operand']
  %s0 = inlined_call_operand.hbm [shape: bf16[8,8,32], index: 0, kind: input, shape index: {}]
  %s1 = inlined_call_operand.hbm [shape: bf16[32,512], index: 1, kind: input, shape index: {}]
  %s2 = inlined_call_operand.hbm [shape: bf16[128,512], index: 2, kind: input, shape index: {}]
  %s3 = inlined_call_operand.vmem [shape: f32[1,512], index: 3, kind: input, shape index: {}]
  %s4 = inlined_call_operand.hbm [shape: bf16[8,8,128], index: 4, kind: output, shape index: {}]
  %s5 = sld [smem:[#allocation0]]
  $region42: #{tpu_custom_call.1} parent=0
    _
  %s7 = ssub.s32 1, %s5
  %s8 = scalar_select 0, %s7, %s5
  $region1: #{tpu_custom_call.1} parent=0
    #allocation4 [shape = 'u8[16384]{0}', space=vmem, size = 0x4000, scoped, tag = 'input window, operand 0, single buffered']
    #allocation5 [shape = 's32[1]{0}', space=sflag, size = 0x4, scoped, tag = 'scoped memory for tpu_custom_call.1']
    #allocation6 [shape = 's32[1]{0}', space=sflag, size = 0x4, scoped, tag = 'scoped memory for tpu_custom_call.1']
    #allocation7 [shape = 'u8[32768]{0}', space=vmem, size = 0x8000, scoped, tag = 'input window, operand 1, single buffered']
    #allocation8 [shape = 's32[1]{0}', space=sflag, size = 0x4, scoped, tag = 'scoped memory for tpu_custom_call.1']
    #allocation9 [shape = 'u8[131072]{0}', space=vmem, size = 0x20000, scoped, tag = 'input window, operand 2, single buffered']
    #allocation10 [shape = 'u8[16384]{0}', space=vmem, size = 0x4000, scoped, tag = 'output window, operand 0, single buffered']
    %9 = vsyncpa [#allocation5], 0
    %10 = vsyncpa [#allocation8], 0
    %11 = vsyncpa [#allocation6], 0
    // Predicated region
    $region2: #{tpu_custom_call.1} parent=1 // pred_check
      _
    $region3: #{tpu_custom_call.1} parent=1 // pred_check_branch
      %13 = sbr.rel (0) target = $region5
    $region4: #{tpu_custom_call.1} parent=1 // pred_region
      %s15 = ssub.s32 512, 512
      %16 = vsyncadd [#allocation5], %s15
      %s17 = sshll.u32 [#allocation4], 4
      %s18 = int_to_ptr.vmem [resolvable:$true] %s17
      %23 = dma.hbm_to_vmem [thread:$0]  %s0, 512, %s18, [#allocation5], 64, 64, 4
    $region5: #{tpu_custom_call.1} parent=1 // pred_fallthru
      _
    // Predicated region
    $region6: #{tpu_custom_call.1} parent=1 // pred_check
      _
    $region7: #{tpu_custom_call.1} parent=1 // pred_check_branch
      %25 = sbr.rel (0) target = $region9
    $region8: #{tpu_custom_call.1} parent=1 // pred_region
      %s27 = ssub.s32 1024, 1024
      %28 = vsyncadd [#allocation8], %s27
      %s29 = sshll.u32 [#allocation7], 4
      %s30 = int_to_ptr.vmem [resolvable:$true] %s29
      %35 = dma.hbm_to_vmem [thread:$0]  %s1, 1024, %s30, [#allocation8], 256, 256, 16
    $region9: #{tpu_custom_call.1} parent=1 // pred_fallthru
      _
    // Predicated region
    $region10: #{tpu_custom_call.1} parent=1 // pred_check
      _
    $region11: #{tpu_custom_call.1} parent=1 // pred_check_branch
      %37 = sbr.rel (0) target = $region13
    $region12: #{tpu_custom_call.1} parent=1 // pred_region
      %s39 = ssub.s32 4096, 4096
      %40 = vsyncadd [#allocation8], %s39
      %s41 = sshll.u32 [#allocation9], 4
      %s42 = int_to_ptr.vmem [resolvable:$true] %s41
      %47 = dma.hbm_to_vmem [thread:$0]  %s2, 4096, %s42, [#allocation8], 256, 256, 16
    $region13: #{tpu_custom_call.1} parent=1 // pred_fallthru
      _
    // Predicated region
    $region14: #{tpu_custom_call.1} parent=1 // pred_check
      _
    $region15: #{tpu_custom_call.1} parent=1 // pred_check_branch
      %49 = sbr.rel (0) target = $region17
    $region16: #{tpu_custom_call.1} parent=1 // pred_region
      _
    $region17: #{tpu_custom_call.1} parent=1 // pred_fallthru
      _
    // Predicated region
    $region18: #{tpu_custom_call.1} parent=1 // pred_check
      _
    $region19: #{tpu_custom_call.1} parent=1 // pred_check_branch
      %51 = sbr.rel (0) target = $region21
    $region20: #{tpu_custom_call.1} parent=1 // pred_region
      %52 = dma.done [#allocation5], 512
    $region21: #{tpu_custom_call.1} parent=1 // pred_fallthru
      _
    // Predicated region
    $region22: #{tpu_custom_call.1} parent=1 // pred_check
      _
    $region23: #{tpu_custom_call.1} parent=1 // pred_check_branch
      %54 = sbr.rel (0) target = $region25
    $region24: #{tpu_custom_call.1} parent=1 // pred_region
      %55 = dma.done [#allocation8], 1024
    $region25: #{tpu_custom_call.1} parent=1 // pred_fallthru
      _
    // Predicated region
    $region26: #{tpu_custom_call.1} parent=1 // pred_check
      _
    $region27: #{tpu_custom_call.1} parent=1 // pred_check_branch
      %57 = sbr.rel (0) target = $region29
    $region28: #{tpu_custom_call.1} parent=1 // pred_region
      %58 = dma.done [#allocation8], 4096
    $region29: #{tpu_custom_call.1} parent=1 // pred_fallthru
      _
    %p60 = scmp.eq.s32.totalorder 0, 0
    // Predicated region
    $region30: #{tpu_custom_call.1} parent=1 // pred_check
      %p61 = pneg %p60
    $region31: #{tpu_custom_call.1} parent=1 // pred_check_branch
      %63 = sbr.rel (%p61) target = $region33
    $region32: #{tpu_custom_call.1} parent=1 // pred_region
      %64 = vst [vmem:[#allocation2] sm:$0xff] 0.0
      %65 = vst [vmem:[#allocation3] sm:$0xff] 0.0
    $region33: #{tpu_custom_call.1} parent=1 // pred_fallthru
      _
    %v66 = vld [vmem:[#allocation7] sm:$0xff]
    %v67 = vld [vmem:[#allocation7 + $0x8] sm:$0xff]
    %v68 = vld [vmem:[#allocation7 + $0x10] sm:$0xff]
    %v69 = vld [vmem:[#allocation7 + $0x18] sm:$0xff]
    %v70 = vld [vmem:[#allocation7 + $0x20] sm:$0xff]
    %v71 = vld [vmem:[#allocation7 + $0x28] sm:$0xff]
    %v72 = vld [vmem:[#allocation7 + $0x30] sm:$0xff]
    %v73 = vld [vmem:[#allocation7 + $0x38] sm:$0xff]
    %v74 = vld [vmem:[#allocation9] sm:$0xff]
    %v75 = vld [vmem:[#allocation9 + $0x8] sm:$0xff]
    %v76 = vld [vmem:[#allocation9 + $0x10] sm:$0xff]
    %v77 = vld [vmem:[#allocation9 + $0x18] sm:$0xff]
    %v78 = vld [vmem:[#allocation9 + $0x20] sm:$0xff]
    %v79 = vld [vmem:[#allocation9 + $0x28] sm:$0xff]
    %v80 = vld [vmem:[#allocation9 + $0x30] sm:$0xff]
    %v81 = vld [vmem:[#allocation9 + $0x38] sm:$0xff]
    %v82 = vld [vmem:[#allocation9 + $0x40] sm:$0xff]
    %v83 = vld [vmem:[#allocation9 + $0x48] sm:$0xff]
    %v84 = vld [vmem:[#allocation9 + $0x50] sm:$0xff]
    %v85 = vld [vmem:[#allocation9 + $0x58] sm:$0xff]
    %v86 = vld [vmem:[#allocation9 + $0x60] sm:$0xff]
    %v87 = vld [vmem:[#allocation9 + $0x68] sm:$0xff]
    %v88 = vld [vmem:[#allocation9 + $0x70] sm:$0xff]
    %v89 = vld [vmem:[#allocation9 + $0x78] sm:$0xff]
    %v90 = vld [vmem:[#allocation9 + $0x80] sm:$0xff]
    %v91 = vld [vmem:[#allocation9 + $0x88] sm:$0xff]
    %v92 = vld [vmem:[#allocation9 + $0x90] sm:$0xff]
    %v93 = vld [vmem:[#allocation9 + $0x98] sm:$0xff]
    %v94 = vld [vmem:[#allocation9 + $0xa0] sm:$0xff]
    %v95 = vld [vmem:[#allocation9 + $0xa8] sm:$0xff]
    %v96 = vld [vmem:[#allocation9 + $0xb0] sm:$0xff]
    %v97 = vld [vmem:[#allocation9 + $0xb8] sm:$0xff]
    %v98 = vld [vmem:[#allocation9 + $0xc0] sm:$0xff]
    %v99 = vld [vmem:[#allocation9 + $0xc8] sm:$0xff]
    %v100 = vld [vmem:[#allocation9 + $0xd0] sm:$0xff]
    %v101 = vld [vmem:[#allocation9 + $0xd8] sm:$0xff]
    %v102 = vld [vmem:[#allocation9 + $0xe0] sm:$0xff]
    %v103 = vld [vmem:[#allocation9 + $0xe8] sm:$0xff]
    %v104 = vld [vmem:[#allocation9 + $0xf0] sm:$0xff]
    %v105 = vld [vmem:[#allocation9 + $0xf8] sm:$0xff]
    %v106 = vld [vmem:[%s3] sm:$0xf]
    %v108 = vlaneseq
    %v109 = vshrl.u32 %v108, 7
    %v110 = vsub.s32 0, %v109
    %v111 = vrot.slane %v106, %v110
    %v112 = vlaneseq
    %v113 = vshrl.u32 %v112, 7
    %v114 = vsub.s32 1, %v113
    %v115 = vrot.slane %v106, %v114
    %v116 = vlaneseq
    %v117 = vshrl.u32 %v116, 7
    %v118 = vsub.s32 2, %v117
    %v119 = vrot.slane %v106, %v118
    %v120 = vlaneseq
    %v121 = vshrl.u32 %v120, 7
    %v122 = vsub.s32 3, %v121
    %v123 = vrot.slane %v106, %v122
    %v128 = vld [vmem:[#allocation2] sm:$0xff]
    %v129 = vld [vmem:[#allocation3] sm:$0xff]
    %v130 = vld [vmem:[#allocation4] sm:$0xf]
    %v131 = vpack.c.bf16 %v128, %v128
    %v164 = vunpack.c.l.b16 %v74
    %v165 = vunpack.c.h.b16 %v74
    %v166 = vunpack.c.l.b16 %v75
    %v167 = vunpack.c.h.b16 %v75
    %v168 = vunpack.c.l.b16 %v76
    %v169 = vunpack.c.h.b16 %v76
    %v170 = vunpack.c.l.b16 %v77
    %v171 = vunpack.c.h.b16 %v77
    %v172 = vunpack.c.l.b16 %v78
    %v173 = vunpack.c.h.b16 %v78
    %v174 = vunpack.c.l.b16 %v79
    %v175 = vunpack.c.h.b16 %v79
    %v176 = vunpack.c.l.b16 %v80
    %v177 = vunpack.c.h.b16 %v80
    %v178 = vunpack.c.l.b16 %v81
    %v179 = vunpack.c.h.b16 %v81
    %v180 = vunpack.c.l.b16 %v82
    %v181 = vunpack.c.h.b16 %v82
    %v182 = vunpack.c.l.b16 %v83
    %v183 = vunpack.c.h.b16 %v83
    %v184 = vunpack.c.l.b16 %v84
    %v185 = vunpack.c.h.b16 %v84
    %v186 = vunpack.c.l.b16 %v85
    %v187 = vunpack.c.h.b16 %v85
    %v188 = vunpack.c.l.b16 %v86
    %v189 = vunpack.c.h.b16 %v86
    %v190 = vunpack.c.l.b16 %v87
    %v191 = vunpack.c.h.b16 %v87
    %v192 = vunpack.c.l.b16 %v88
    %v193 = vunpack.c.h.b16 %v88
    %v194 = vunpack.c.l.b16 %v89
    %v195 = vunpack.c.h.b16 %v89
    %v196 = vunpack.c.l.b16 %v90
    %v197 = vunpack.c.h.b16 %v90
    %v198 = vunpack.c.l.b16 %v91
    %v199 = vunpack.c.h.b16 %v91
    %v200 = vunpack.c.l.b16 %v92
    %v201 = vunpack.c.h.b16 %v92
    %v202 = vunpack.c.l.b16 %v93
    %v203 = vunpack.c.h.b16 %v93
    %v204 = vunpack.c.l.b16 %v94
    %v205 = vunpack.c.h.b16 %v94
    %v206 = vunpack.c.l.b16 %v95
    %v207 = vunpack.c.h.b16 %v95
    %v208 = vunpack.c.l.b16 %v96
    %v209 = vunpack.c.h.b16 %v96
    %v210 = vunpack.c.l.b16 %v97
    %v211 = vunpack.c.h.b16 %v97
    %v212 = vunpack.c.l.b16 %v98
    %v213 = vunpack.c.h.b16 %v98
    %v214 = vunpack.c.l.b16 %v99
    %v215 = vunpack.c.h.b16 %v99
    %v216 = vunpack.c.l.b16 %v100
    %v217 = vunpack.c.h.b16 %v100
    %v218 = vunpack.c.l.b16 %v101
    %v219 = vunpack.c.h.b16 %v101
    %v220 = vunpack.c.l.b16 %v102
    %v221 = vunpack.c.h.b16 %v102
    %v222 = vunpack.c.l.b16 %v103
    %v223 = vunpack.c.h.b16 %v103
    %v224 = vunpack.c.l.b16 %v104
    %v225 = vunpack.c.h.b16 %v104
    %v226 = vunpack.c.l.b16 %v105
    %v227 = vunpack.c.h.b16 %v105
    %v228 = vpack.c.b16 %v168, %v164
    %v229 = vpack.c.b16 %v169, %v165
    %v230 = vpack.c.b16 %v170, %v166
    %v231 = vpack.c.b16 %v171, %v167
    %v232 = vpack.c.b16 %v176, %v172
    %v233 = vpack.c.b16 %v177, %v173
    %v234 = vpack.c.b16 %v178, %v174
    %v235 = vpack.c.b16 %v179, %v175
    %v236 = vpack.c.b16 %v184, %v180
    %v237 = vpack.c.b16 %v185, %v181
    %v238 = vpack.c.b16 %v186, %v182
    %v239 = vpack.c.b16 %v187, %v183
    %v240 = vpack.c.b16 %v192, %v188
    %v241 = vpack.c.b16 %v193, %v189
    %v242 = vpack.c.b16 %v194, %v190
    %v243 = vpack.c.b16 %v195, %v191
    %v244 = vpack.c.b16 %v200, %v196
    %v245 = vpack.c.b16 %v201, %v197
    %v246 = vpack.c.b16 %v202, %v198
    %v247 = vpack.c.b16 %v203, %v199
    %v248 = vpack.c.b16 %v208, %v204
    %v249 = vpack.c.b16 %v209, %v205
    %v250 = vpack.c.b16 %v210, %v206
    %v251 = vpack.c.b16 %v211, %v207
    %v252 = vpack.c.b16 %v216, %v212
    %v253 = vpack.c.b16 %v217, %v213
    %v254 = vpack.c.b16 %v218, %v214
    %v255 = vpack.c.b16 %v219, %v215
    %v256 = vpack.c.b16 %v224, %v220
    %v257 = vpack.c.b16 %v225, %v221
    %v258 = vpack.c.b16 %v226, %v222
    %v259 = vpack.c.b16 %v227, %v223
    %292 = vmatprep.subr.bf16.mxu0 %v229
    %293 = vmatpush1.bf16.msra.mxu0 %v228
    %294 = vmatprep.subr.bf16.mxu0 %v233
    %295 = vmatpush1.bf16.msra.mxu0 %v232
    %296 = vmatprep.subr.bf16.mxu0 %v237
    %297 = vmatpush1.bf16.msra.mxu0 %v236
    %298 = vmatprep.subr.bf16.mxu0 %v241
    %299 = vmatpush1.bf16.msra.mxu0 %v240
    %300 = vmatprep.subr.bf16.mxu0 %v245
    %301 = vmatpush1.bf16.msra.mxu0 %v244
    %302 = vmatprep.subr.bf16.mxu0 %v249
    %303 = vmatpush1.bf16.msra.mxu0 %v248
    %304 = vmatprep.subr.bf16.mxu0 %v253
    %305 = vmatpush1.bf16.msra.mxu0 %v252
    %306 = vmatprep.subr.bf16.mxu0 %v257
    %307 = vmatpush1.bf16.msra.mxu0 %v256
    %308 = vmatprep.subr.bf16.mxu0 0
    %309 = vmatpush1.bf16.msra.mxu0 0
    %310 = vmatprep.subr.bf16.mxu0 0
    %311 = vmatpush1.bf16.msra.mxu0 0
    %312 = vmatprep.subr.bf16.mxu0 0
    %313 = vmatpush1.bf16.msra.mxu0 0
    %314 = vmatprep.subr.bf16.mxu0 0
    %315 = vmatpush1.bf16.msra.mxu0 0
    %316 = vmatprep.subr.bf16.mxu0 0
    %317 = vmatpush1.bf16.msra.mxu0 0
    %318 = vmatprep.subr.bf16.mxu0 0
    %319 = vmatpush1.bf16.msra.mxu0 0
    %320 = vmatprep.subr.bf16.mxu0 0
    %321 = vmatpush1.bf16.msra.mxu0 0
    %322 = vmatprep.subr.bf16.mxu0 0
    %323 = vmatpush1.bf16.msra.mxu0 0
    %324 = vmatprep.mubr.bf16.mxu0 0
    %325 = vmatmul.mubr.bf16.gmra.mrb[0].mxu0 %v131
    %v326 = vpop.f32.mrb[0].mxu0
    %v327 = vadd.f32 0.0, %v326
    %v328 = vpop.f32.mrb[0].mxu0
    %v329 = vadd.f32 0.0, %v328
    %v330 = vpop.f32.mrb[0].mxu0
    %v331 = vpop.f32.mrb[0].mxu0
    %332 = vdwg.mxu0
    %333 = vmatprep.subr.bf16.mxu0 %v231
    %334 = vmatpush1.bf16.msra.mxu0 %v230
    %335 = vmatprep.subr.bf16.mxu0 %v235
    %336 = vmatpush1.bf16.msra.mxu0 %v234
    %337 = vmatprep.subr.bf16.mxu0 %v239
    %338 = vmatpush1.bf16.msra.mxu0 %v238
    %339 = vmatprep.subr.bf16.mxu0 %v243
    %340 = vmatpush1.bf16.msra.mxu0 %v242
    %341 = vmatprep.subr.bf16.mxu0 %v247
    %342 = vmatpush1.bf16.msra.mxu0 %v246
    %343 = vmatprep.subr.bf16.mxu0 %v251
    %344 = vmatpush1.bf16.msra.mxu0 %v250
    %345 = vmatprep.subr.bf16.mxu0 %v255
    %346 = vmatpush1.bf16.msra.mxu0 %v254
    %347 = vmatprep.subr.bf16.mxu0 %v259
    %348 = vmatpush1.bf16.msra.mxu0 %v258
    %349 = vmatprep.subr.bf16.mxu0 0
    %350 = vmatpush1.bf16.msra.mxu0 0
    %351 = vmatprep.subr.bf16.mxu0 0
    %352 = vmatpush1.bf16.msra.mxu0 0
    %353 = vmatprep.subr.bf16.mxu0 0
    %354 = vmatpush1.bf16.msra.mxu0 0
    %355 = vmatprep.subr.bf16.mxu0 0
    %356 = vmatpush1.bf16.msra.mxu0 0
    %357 = vmatprep.subr.bf16.mxu0 0
    %358 = vmatpush1.bf16.msra.mxu0 0
    %359 = vmatprep.subr.bf16.mxu0 0
    %360 = vmatpush1.bf16.msra.mxu0 0
    %361 = vmatprep.subr.bf16.mxu0 0
    %362 = vmatpush1.bf16.msra.mxu0 0
    %363 = vmatprep.subr.bf16.mxu0 0
    %364 = vmatpush1.bf16.msra.mxu0 0
    %365 = vmatprep.mubr.bf16.mxu0 0
    %366 = vmatmul.mubr.bf16.gmra.mrb[0].mxu0 %v131
    %v367 = vpop.f32.mrb[0].mxu0
    %v368 = vadd.f32 0.0, %v367
    %v369 = vpop.f32.mrb[0].mxu0
    %v370 = vadd.f32 0.0, %v369
    %v371 = vpop.f32.mrb[0].mxu0
    %v372 = vpop.f32.mrb[0].mxu0
    %373 = vdwg.mxu0
    %v382 = vunpack.c.l.b16 %v66
    %v383 = vunpack.c.h.b16 %v66
    %v384 = vunpack.c.l.b16 %v67
    %v385 = vunpack.c.h.b16 %v67
    %v386 = vunpack.c.l.b16 %v68
    %v387 = vunpack.c.h.b16 %v68
    %v388 = vunpack.c.l.b16 %v69
    %v389 = vunpack.c.h.b16 %v69
    %v390 = vunpack.c.l.b16 %v70
    %v391 = vunpack.c.h.b16 %v70
    %v392 = vunpack.c.l.b16 %v71
    %v393 = vunpack.c.h.b16 %v71
    %v394 = vunpack.c.l.b16 %v72
    %v395 = vunpack.c.h.b16 %v72
    %v396 = vunpack.c.l.b16 %v73
    %v397 = vunpack.c.h.b16 %v73
    %v398 = vpack.c.b16 %v386, %v382
    %v399 = vpack.c.b16 %v387, %v383
    %v400 = vpack.c.b16 %v388, %v384
    %v401 = vpack.c.b16 %v389, %v385
    %v402 = vpack.c.b16 %v394, %v390
    %v403 = vpack.c.b16 %v395, %v391
    %v404 = vpack.c.b16 %v396, %v392
    %v405 = vpack.c.b16 %v397, %v393
    %vm414 = vcmask 261120
    %v416 = vsel %vm414, %v130, 0
    %418 = vmatprep.subr.bf16.mxu0 %v399
    %419 = vmatpush1.bf16.msra.mxu0 %v398
    %420 = vmatprep.subr.bf16.mxu0 %v403
    %421 = vmatpush1.bf16.msra.mxu0 %v402
    %422 = vmatprep.subr.bf16.mxu0 0
    %423 = vmatpush1.bf16.msra.mxu0 0
    %424 = vmatprep.subr.bf16.mxu0 0
    %425 = vmatpush1.bf16.msra.mxu0 0
    %426 = vmatprep.subr.bf16.mxu0 0
    %427 = vmatpush1.bf16.msra.mxu0 0
    %428 = vmatprep.subr.bf16.mxu0 0
    %429 = vmatpush1.bf16.msra.mxu0 0
    %430 = vmatprep.subr.bf16.mxu0 0
    %431 = vmatpush1.bf16.msra.mxu0 0
    %432 = vmatprep.subr.bf16.mxu0 0
    %433 = vmatpush1.bf16.msra.mxu0 0
    %434 = vmatprep.subr.bf16.mxu0 0
    %435 = vmatpush1.bf16.msra.mxu0 0
    %436 = vmatprep.subr.bf16.mxu0 0
    %437 = vmatpush1.bf16.msra.mxu0 0
    %438 = vmatprep.subr.bf16.mxu0 0
    %439 = vmatpush1.bf16.msra.mxu0 0
    %440 = vmatprep.subr.bf16.mxu0 0
    %441 = vmatpush1.bf16.msra.mxu0 0
    %442 = vmatprep.subr.bf16.mxu0 0
    %443 = vmatpush1.bf16.msra.mxu0 0
    %444 = vmatprep.subr.bf16.mxu0 0
    %445 = vmatpush1.bf16.msra.mxu0 0
    %446 = vmatprep.subr.bf16.mxu0 0
    %447 = vmatpush1.bf16.msra.mxu0 0
    %448 = vmatprep.subr.bf16.mxu0 0
    %449 = vmatpush1.bf16.msra.mxu0 0
    %450 = vmatprep.mubr.bf16.mxu0 0
    %451 = vmatmul.mubr.bf16.gmra.mrb[0].mxu0 %v416
    %v452 = vpop.f32.mrb[0].mxu0
    %v453 = vadd.f32 %v327, %v452
    %v454 = vpop.f32.mrb[0].mxu0
    %v455 = vadd.f32 %v329, %v454
    %v456 = vpop.f32.mrb[0].mxu0
    %v457 = vpop.f32.mrb[0].mxu0
    %458 = vdwg.mxu0
    %459 = vmatprep.subr.bf16.mxu0 %v401
    %460 = vmatpush1.bf16.msra.mxu0 %v400
    %461 = vmatprep.subr.bf16.mxu0 %v405
    %462 = vmatpush1.bf16.msra.mxu0 %v404
    %463 = vmatprep.subr.bf16.mxu0 0
    %464 = vmatpush1.bf16.msra.mxu0 0
    %465 = vmatprep.subr.bf16.mxu0 0
    %466 = vmatpush1.bf16.msra.mxu0 0
    %467 = vmatprep.subr.bf16.mxu0 0
    %468 = vmatpush1.bf16.msra.mxu0 0
    %469 = vmatprep.subr.bf16.mxu0 0
    %470 = vmatpush1.bf16.msra.mxu0 0
    %471 = vmatprep.subr.bf16.mxu0 0
    %472 = vmatpush1.bf16.msra.mxu0 0
    %473 = vmatprep.subr.bf16.mxu0 0
    %474 = vmatpush1.bf16.msra.mxu0 0
    %475 = vmatprep.subr.bf16.mxu0 0
    %476 = vmatpush1.bf16.msra.mxu0 0
    %477 = vmatprep.subr.bf16.mxu0 0
    %478 = vmatpush1.bf16.msra.mxu0 0
    %479 = vmatprep.subr.bf16.mxu0 0
    %480 = vmatpush1.bf16.msra.mxu0 0
    %481 = vmatprep.subr.bf16.mxu0 0
    %482 = vmatpush1.bf16.msra.mxu0 0
    %483 = vmatprep.subr.bf16.mxu0 0
    %484 = vmatpush1.bf16.msra.mxu0 0
    %485 = vmatprep.subr.bf16.mxu0 0
    %486 = vmatpush1.bf16.msra.mxu0 0
    %487 = vmatprep.subr.bf16.mxu0 0
    %488 = vmatpush1.bf16.msra.mxu0 0
    %489 = vmatprep.subr.bf16.mxu0 0
    %490 = vmatpush1.bf16.msra.mxu0 0
    %491 = vmatprep.mubr.bf16.mxu0 0
    %492 = vmatmul.mubr.bf16.gmra.mrb[0].mxu0 %v416
    %v493 = vpop.f32.mrb[0].mxu0
    %v494 = vadd.f32 %v368, %v493
    %v495 = vpop.f32.mrb[0].mxu0
    %v496 = vadd.f32 %v370, %v495
    %v497 = vpop.f32.mrb[0].mxu0
    %v498 = vpop.f32.mrb[0].mxu0
    %499 = vdwg.mxu0
    %v500 = vadd.f32 %v453, %v111
    %v501 = vadd.f32 %v455, %v115
    %v502 = vadd.f32 %v494, %v119
    %v503 = vadd.f32 %v496, %v123
    %v504 = vxor.u32 %v500, 2147483648
    %v505 = vmul.f32 %v504, 1.442695
    %v506 = vpow.pop %v505
    %v507 = vadd.f32 %v506, 1.0
    %v508 = vrcp.pop %v507
    %v509 = vmul.f32 1.0, %v508
    %v510 = vxor.u32 %v501, 2147483648
    %v511 = vmul.f32 %v510, 1.442695
    %v512 = vpow.pop %v511
    %v513 = vadd.f32 %v512, 1.0
    %v514 = vrcp.pop %v513
    %v515 = vmul.f32 1.0, %v514
    %v516 = vtanh.pop %v502
    %v517 = vxor.u32 %v503, 2147483648
    %v518 = vmul.f32 %v517, 1.442695
    %v519 = vpow.pop %v518
    %v520 = vadd.f32 %v519, 1.0
    %v521 = vrcp.pop %v520
    %v522 = vmul.f32 1.0, %v521
    %v523 = vmul.f32 %v515, %v129
    %v524 = vmul.f32 %v509, %v516
    %v525 = vadd.f32 %v523, %v524
    %v526 = vtanh.pop %v525
    %v527 = vmul.f32 %v522, %v526
    %v528 = vpack.c.bf16 %v527, %v527
    %529 = vst [vmem:[#allocation10] sm:$0xf] %v528
    %s530 = scalar_lea.vmem [#allocation4], 4
    %v531 = vld [vmem:[%s530] sm:$0xf]
    %532 = vmatprep.subr.bf16.mxu0 %v229
    %533 = vmatpush1.bf16.msra.mxu0 %v228
    %534 = vmatprep.subr.bf16.mxu0 %v233
    %535 = vmatpush1.bf16.msra.mxu0 %v232
    %536 = vmatprep.subr.bf16.mxu0 %v237
    %537 = vmatpush1.bf16.msra.mxu0 %v236
    %538 = vmatprep.subr.bf16.mxu0 %v241
    %539 = vmatpush1.bf16.msra.mxu0 %v240
    %540 = vmatprep.subr.bf16.mxu0 %v245
    %541 = vmatpush1.bf16.msra.mxu0 %v244
    %542 = vmatprep.subr.bf16.mxu0 %v249
    %543 = vmatpush1.bf16.msra.mxu0 %v248
    %544 = vmatprep.subr.bf16.mxu0 %v253
    %545 = vmatpush1.bf16.msra.mxu0 %v252
    %546 = vmatprep.subr.bf16.mxu0 %v257
    %547 = vmatpush1.bf16.msra.mxu0 %v256
    %548 = vmatprep.subr.bf16.mxu0 0
    %549 = vmatpush1.bf16.msra.mxu0 0
    %550 = vmatprep.subr.bf16.mxu0 0
    %551 = vmatpush1.bf16.msra.mxu0 0
    %552 = vmatprep.subr.bf16.mxu0 0
    %553 = vmatpush1.bf16.msra.mxu0 0
    %554 = vmatprep.subr.bf16.mxu0 0
    %555 = vmatpush1.bf16.msra.mxu0 0
    %556 = vmatprep.subr.bf16.mxu0 0
    %557 = vmatpush1.bf16.msra.mxu0 0
    %558 = vmatprep.subr.bf16.mxu0 0
    %559 = vmatpush1.bf16.msra.mxu0 0
    %560 = vmatprep.subr.bf16.mxu0 0
    %561 = vmatpush1.bf16.msra.mxu0 0
    %562 = vmatprep.subr.bf16.mxu0 0
    %563 = vmatpush1.bf16.msra.mxu0 0
    %564 = vmatprep.mubr.bf16.mxu0 0
    %565 = vmatmul.mubr.bf16.gmra.mrb[0].mxu0 %v528
    %v566 = vpop.f32.mrb[0].mxu0
    %v567 = vadd.f32 0.0, %v566
    %v568 = vpop.f32.mrb[0].mxu0
    %v569 = vadd.f32 0.0, %v568
    %v570 = vpop.f32.mrb[0].mxu0
    %v571 = vpop.f32.mrb[0].mxu0
    %572 = vdwg.mxu0
    %573 = vmatprep.subr.bf16.mxu0 %v231
    %574 = vmatpush1.bf16.msra.mxu0 %v230
    %575 = vmatprep.subr.bf16.mxu0 %v235
    %576 = vmatpush1.bf16.msra.mxu0 %v234
    %577 = vmatprep.subr.bf16.mxu0 %v239
    %578 = vmatpush1.bf16.msra.mxu0 %v238
    %579 = vmatprep.subr.bf16.mxu0 %v243
    %580 = vmatpush1.bf16.msra.mxu0 %v242
    %581 = vmatprep.subr.bf16.mxu0 %v247
    %582 = vmatpush1.bf16.msra.mxu0 %v246
    %583 = vmatprep.subr.bf16.mxu0 %v251
    %584 = vmatpush1.bf16.msra.mxu0 %v250
    %585 = vmatprep.subr.bf16.mxu0 %v255
    %586 = vmatpush1.bf16.msra.mxu0 %v254
    %587 = vmatprep.subr.bf16.mxu0 %v259
    %588 = vmatpush1.bf16.msra.mxu0 %v258
    %589 = vmatprep.subr.bf16.mxu0 0
    %590 = vmatpush1.bf16.msra.mxu0 0
    %591 = vmatprep.subr.bf16.mxu0 0
    %592 = vmatpush1.bf16.msra.mxu0 0
    %593 = vmatprep.subr.bf16.mxu0 0
    %594 = vmatpush1.bf16.msra.mxu0 0
    %595 = vmatprep.subr.bf16.mxu0 0
    %596 = vmatpush1.bf16.msra.mxu0 0
    %597 = vmatprep.subr.bf16.mxu0 0
    %598 = vmatpush1.bf16.msra.mxu0 0
    %599 = vmatprep.subr.bf16.mxu0 0
    %600 = vmatpush1.bf16.msra.mxu0 0
    %601 = vmatprep.subr.bf16.mxu0 0
    %602 = vmatpush1.bf16.msra.mxu0 0
    %603 = vmatprep.subr.bf16.mxu0 0
    %604 = vmatpush1.bf16.msra.mxu0 0
    %605 = vmatprep.mubr.bf16.mxu0 0
    %606 = vmatmul.mubr.bf16.gmra.mrb[0].mxu0 %v528
    %v607 = vpop.f32.mrb[0].mxu0
    %v608 = vadd.f32 0.0, %v607
    %v609 = vpop.f32.mrb[0].mxu0
    %v610 = vadd.f32 0.0, %v609
    %v611 = vpop.f32.mrb[0].mxu0
    %v612 = vpop.f32.mrb[0].mxu0
    %613 = vdwg.mxu0
    %v615 = vsel %vm414, %v531, 0
    %617 = vmatprep.subr.bf16.mxu0 %v399
    %618 = vmatpush1.bf16.msra.mxu0 %v398
    %619 = vmatprep.subr.bf16.mxu0 %v403
    %620 = vmatpush1.bf16.msra.mxu0 %v402
    %621 = vmatprep.subr.bf16.mxu0 0
    %622 = vmatpush1.bf16.msra.mxu0 0
    %623 = vmatprep.subr.bf16.mxu0 0
    %624 = vmatpush1.bf16.msra.mxu0 0
    %625 = vmatprep.subr.bf16.mxu0 0
    %626 = vmatpush1.bf16.msra.mxu0 0
    %627 = vmatprep.subr.bf16.mxu0 0
    %628 = vmatpush1.bf16.msra.mxu0 0
    %629 = vmatprep.subr.bf16.mxu0 0
    %630 = vmatpush1.bf16.msra.mxu0 0
    %631 = vmatprep.subr.bf16.mxu0 0
    %632 = vmatpush1.bf16.msra.mxu0 0
    %633 = vmatprep.subr.bf16.mxu0 0
    %634 = vmatpush1.bf16.msra.mxu0 0
    %635 = vmatprep.subr.bf16.mxu0 0
    %636 = vmatpush1.bf16.msra.mxu0 0
    %637 = vmatprep.subr.bf16.mxu0 0
    %638 = vmatpush1.bf16.msra.mxu0 0
    %639 = vmatprep.subr.bf16.mxu0 0
    %640 = vmatpush1.bf16.msra.mxu0 0
    %641 = vmatprep.subr.bf16.mxu0 0
    %642 = vmatpush1.bf16.msra.mxu0 0
    %643 = vmatprep.subr.bf16.mxu0 0
    %644 = vmatpush1.bf16.msra.mxu0 0
    %645 = vmatprep.subr.bf16.mxu0 0
    %646 = vmatpush1.bf16.msra.mxu0 0
    %647 = vmatprep.subr.bf16.mxu0 0
    %648 = vmatpush1.bf16.msra.mxu0 0
    %649 = vmatprep.mubr.bf16.mxu0 0
    %650 = vmatmul.mubr.bf16.gmra.mrb[0].mxu0 %v615
    %v651 = vpop.f32.mrb[0].mxu0
    %v652 = vadd.f32 %v567, %v651
    %v653 = vpop.f32.mrb[0].mxu0
    %v654 = vadd.f32 %v569, %v653
    %v655 = vpop.f32.mrb[0].mxu0
    %v656 = vpop.f32.mrb[0].mxu0
    %657 = vdwg.mxu0
    %658 = vmatprep.subr.bf16.mxu0 %v401
    %659 = vmatpush1.bf16.msra.mxu0 %v400
    %660 = vmatprep.subr.bf16.mxu0 %v405
    %661 = vmatpush1.bf16.msra.mxu0 %v404
    %662 = vmatprep.subr.bf16.mxu0 0
    %663 = vmatpush1.bf16.msra.mxu0 0
    %664 = vmatprep.subr.bf16.mxu0 0
    %665 = vmatpush1.bf16.msra.mxu0 0
    %666 = vmatprep.subr.bf16.mxu0 0
    %667 = vmatpush1.bf16.msra.mxu0 0
    %668 = vmatprep.subr.bf16.mxu0 0
    %669 = vmatpush1.bf16.msra.mxu0 0
    %670 = vmatprep.subr.bf16.mxu0 0
    %671 = vmatpush1.bf16.msra.mxu0 0
    %672 = vmatprep.subr.bf16.mxu0 0
    %673 = vmatpush1.bf16.msra.mxu0 0
    %674 = vmatprep.subr.bf16.mxu0 0
    %675 = vmatpush1.bf16.msra.mxu0 0
    %676 = vmatprep.subr.bf16.mxu0 0
    %677 = vmatpush1.bf16.msra.mxu0 0
    %678 = vmatprep.subr.bf16.mxu0 0
    %679 = vmatpush1.bf16.msra.mxu0 0
    %680 = vmatprep.subr.bf16.mxu0 0
    %681 = vmatpush1.bf16.msra.mxu0 0
    %682 = vmatprep.subr.bf16.mxu0 0
    %683 = vmatpush1.bf16.msra.mxu0 0
    %684 = vmatprep.subr.bf16.mxu0 0
    %685 = vmatpush1.bf16.msra.mxu0 0
    %686 = vmatprep.subr.bf16.mxu0 0
    %687 = vmatpush1.bf16.msra.mxu0 0
    %688 = vmatprep.subr.bf16.mxu0 0
    %689 = vmatpush1.bf16.msra.mxu0 0
    %690 = vmatprep.mubr.bf16.mxu0 0
    %691 = vmatmul.mubr.bf16.gmra.mrb[0].mxu0 %v615
    %v692 = vpop.f32.mrb[0].mxu0
    %v693 = vadd.f32 %v608, %v692
    %v694 = vpop.f32.mrb[0].mxu0
    %v695 = vadd.f32 %v610, %v694
    %v696 = vpop.f32.mrb[0].mxu0
    %v697 = vpop.f32.mrb[0].mxu0
    %698 = vdwg.mxu0
    %v699 = vadd.f32 %v652, %v111
    %v700 = vadd.f32 %v654, %v115
    %v701 = vadd.f32 %v693, %v119
    %v702 = vadd.f32 %v695, %v123
    %v703 = vxor.u32 %v699, 2147483648
    %v704 = vmul.f32 %v703, 1.442695
    %v705 = vpow.pop %v704
    %v706 = vadd.f32 %v705, 1.0
    %v707 = vrcp.pop %v706
    %v708 = vmul.f32 1.0, %v707
    %v709 = vxor.u32 %v700, 2147483648
    %v710 = vmul.f32 %v709, 1.442695
    %v711 = vpow.pop %v710
    %v712 = vadd.f32 %v711, 1.0
    %v713 = vrcp.pop %v712
    %v714 = vmul.f32 1.0, %v713
    %v715 = vtanh.pop %v701
    %v716 = vxor.u32 %v702, 2147483648
    %v717 = vmul.f32 %v716, 1.442695
    %v718 = vpow.pop %v717
    %v719 = vadd.f32 %v718, 1.0
    %v720 = vrcp.pop %v719
    %v721 = vmul.f32 1.0, %v720
    %v722 = vmul.f32 %v714, %v525
    %v723 = vmul.f32 %v708, %v715
    %v724 = vadd.f32 %v722, %v723
    %v725 = vtanh.pop %v724
    %v726 = vmul.f32 %v721, %v725
    %v727 = vpack.c.bf16 %v726, %v726
    %s728 = scalar_lea.vmem [#allocation10], 4
    %729 = vst [vmem:[%s728] sm:$0xf] %v727
    %s730 = scalar_lea.vmem [#allocation4], 8
    %v731 = vld [vmem:[%s730] sm:$0xf]
    %732 = vmatprep.subr.bf16.mxu0 %v229
    %733 = vmatpush1.bf16.msra.mxu0 %v228
    %734 = vmatprep.subr.bf16.mxu0 %v233
    %735 = vmatpush1.bf16.msra.mxu0 %v232
    %736 = vmatprep.subr.bf16.mxu0 %v237
    %737 = vmatpush1.bf16.msra.mxu0 %v236
    %738 = vmatprep.subr.bf16.mxu0 %v241
    %739 = vmatpush1.bf16.msra.mxu0 %v240
    %740 = vmatprep.subr.bf16.mxu0 %v245
    %741 = vmatpush1.bf16.msra.mxu0 %v244
    %742 = vmatprep.subr.bf16.mxu0 %v249
    %743 = vmatpush1.bf16.msra.mxu0 %v248
    %744 = vmatprep.subr.bf16.mxu0 %v253
    %745 = vmatpush1.bf16.msra.mxu0 %v252
    %746 = vmatprep.subr.bf16.mxu0 %v257
    %747 = vmatpush1.bf16.msra.mxu0 %v256
    %748 = vmatprep.subr.bf16.mxu0 0
    %749 = vmatpush1.bf16.msra.mxu0 0
    %750 = vmatprep.subr.bf16.mxu0 0
    %751 = vmatpush1.bf16.msra.mxu0 0
    %752 = vmatprep.subr.bf16.mxu0 0
    %753 = vmatpush1.bf16.msra.mxu0 0
    %754 = vmatprep.subr.bf16.mxu0 0
    %755 = vmatpush1.bf16.msra.mxu0 0
    %756 = vmatprep.subr.bf16.mxu0 0
    %757 = vmatpush1.bf16.msra.mxu0 0
    %758 = vmatprep.subr.bf16.mxu0 0
    %759 = vmatpush1.bf16.msra.mxu0 0
    %760 = vmatprep.subr.bf16.mxu0 0
    %761 = vmatpush1.bf16.msra.mxu0 0
    %762 = vmatprep.subr.bf16.mxu0 0
    %763 = vmatpush1.bf16.msra.mxu0 0
    %764 = vmatprep.mubr.bf16.mxu0 0
    %765 = vmatmul.mubr.bf16.gmra.mrb[0].mxu0 %v727
    %v766 = vpop.f32.mrb[0].mxu0
    %v767 = vadd.f32 0.0, %v766
    %v768 = vpop.f32.mrb[0].mxu0
    %v769 = vadd.f32 0.0, %v768
    %v770 = vpop.f32.mrb[0].mxu0
    %v771 = vpop.f32.mrb[0].mxu0
    %772 = vdwg.mxu0
    %773 = vmatprep.subr.bf16.mxu0 %v231
    %774 = vmatpush1.bf16.msra.mxu0 %v230
    %775 = vmatprep.subr.bf16.mxu0 %v235
    %776 = vmatpush1.bf16.msra.mxu0 %v234
    %777 = vmatprep.subr.bf16.mxu0 %v239
    %778 = vmatpush1.bf16.msra.mxu0 %v238
    %779 = vmatprep.subr.bf16.mxu0 %v243
    %780 = vmatpush1.bf16.msra.mxu0 %v242
    %781 = vmatprep.subr.bf16.mxu0 %v247
    %782 = vmatpush1.bf16.msra.mxu0 %v246
    %783 = vmatprep.subr.bf16.mxu0 %v251
    %784 = vmatpush1.bf16.msra.mxu0 %v250
    %785 = vmatprep.subr.bf16.mxu0 %v255
    %786 = vmatpush1.bf16.msra.mxu0 %v254
    %787 = vmatprep.subr.bf16.mxu0 %v259
    %788 = vmatpush1.bf16.msra.mxu0 %v258
    %789 = vmatprep.subr.bf16.mxu0 0
    %790 = vmatpush1.bf16.msra.mxu0 0
    %791 = vmatprep.subr.bf16.mxu0 0
    %792 = vmatpush1.bf16.msra.mxu0 0
    %793 = vmatprep.subr.bf16.mxu0 0
    %794 = vmatpush1.bf16.msra.mxu0 0
    %795 = vmatprep.subr.bf16.mxu0 0
    %796 = vmatpush1.bf16.msra.mxu0 0
    %797 = vmatprep.subr.bf16.mxu0 0
    %798 = vmatpush1.bf16.msra.mxu0 0
    %799 = vmatprep.subr.bf16.mxu0 0
    %800 = vmatpush1.bf16.msra.mxu0 0
    %801 = vmatprep.subr.bf16.mxu0 0
    %802 = vmatpush1.bf16.msra.mxu0 0
    %803 = vmatprep.subr.bf16.mxu0 0
    %804 = vmatpush1.bf16.msra.mxu0 0
    %805 = vmatprep.mubr.bf16.mxu0 0
    %806 = vmatmul.mubr.bf16.gmra.mrb[0].mxu0 %v727
    %v807 = vpop.f32.mrb[0].mxu0
    %v808 = vadd.f32 0.0, %v807
    %v809 = vpop.f32.mrb[0].mxu0
    %v810 = vadd.f32 0.0, %v809
    %v811 = vpop.f32.mrb[0].mxu0
    %v812 = vpop.f32.mrb[0].mxu0
    %813 = vdwg.mxu0
    %v815 = vsel %vm414, %v731, 0
    %817 = vmatprep.subr.bf16.mxu0 %v399
    %818 = vmatpush1.bf16.msra.mxu0 %v398
    %819 = vmatprep.subr.bf16.mxu0 %v403
    %820 = vmatpush1.bf16.msra.mxu0 %v402
    %821 = vmatprep.subr.bf16.mxu0 0
    %822 = vmatpush1.bf16.msra.mxu0 0
    %823 = vmatprep.subr.bf16.mxu0 0
    %824 = vmatpush1.bf16.msra.mxu0 0
    %825 = vmatprep.subr.bf16.mxu0 0
    %826 = vmatpush1.bf16.msra.mxu0 0
    %827 = vmatprep.subr.bf16.mxu0 0
    %828 = vmatpush1.bf16.msra.mxu0 0
    %829 = vmatprep.subr.bf16.mxu0 0
    %830 = vmatpush1.bf16.msra.mxu0 0
    %831 = vmatprep.subr.bf16.mxu0 0
    %832 = vmatpush1.bf16.msra.mxu0 0
    %833 = vmatprep.subr.bf16.mxu0 0
    %834 = vmatpush1.bf16.msra.mxu0 0
    %835 = vmatprep.subr.bf16.mxu0 0
    %836 = vmatpush1.bf16.msra.mxu0 0
    %837 = vmatprep.subr.bf16.mxu0 0
    %838 = vmatpush1.bf16.msra.mxu0 0
    %839 = vmatprep.subr.bf16.mxu0 0
    %840 = vmatpush1.bf16.msra.mxu0 0
    %841 = vmatprep.subr.bf16.mxu0 0
    %842 = vmatpush1.bf16.msra.mxu0 0
    %843 = vmatprep.subr.bf16.mxu0 0
    %844 = vmatpush1.bf16.msra.mxu0 0
    %845 = vmatprep.subr.bf16.mxu0 0
    %846 = vmatpush1.bf16.msra.mxu0 0
    %847 = vmatprep.subr.bf16.mxu0 0
    %848 = vmatpush1.bf16.msra.mxu0 0
    %849 = vmatprep.mubr.bf16.mxu0 0
    %850 = vmatmul.mubr.bf16.gmra.mrb[0].mxu0 %v815
    %v851 = vpop.f32.mrb[0].mxu0
    %v852 = vadd.f32 %v767, %v851
    %v853 = vpop.f32.mrb[0].mxu0
    %v854 = vadd.f32 %v769, %v853
    %v855 = vpop.f32.mrb[0].mxu0
    %v856 = vpop.f32.mrb[0].mxu0
    %857 = vdwg.mxu0
    %858 = vmatprep.subr.bf16.mxu0 %v401
    %859 = vmatpush1.bf16.msra.mxu0 %v400
    %860 = vmatprep.subr.bf16.mxu0 %v405
    %861 = vmatpush1.bf16.msra.mxu0 %v404
    %862 = vmatprep.subr.bf16.mxu0 0
    %863 = vmatpush1.bf16.msra.mxu0 0
    %864 = vmatprep.subr.bf16.mxu0 0
    %865 = vmatpush1.bf16.msra.mxu0 0
    %866 = vmatprep.subr.bf16.mxu0 0
    %867 = vmatpush1.bf16.msra.mxu0 0
    %868 = vmatprep.subr.bf16.mxu0 0
    %869 = vmatpush1.bf16.msra.mxu0 0
    %870 = vmatprep.subr.bf16.mxu0 0
    %871 = vmatpush1.bf16.msra.mxu0 0
    %872 = vmatprep.subr.bf16.mxu0 0
    %873 = vmatpush1.bf16.msra.mxu0 0
    %874 = vmatprep.subr.bf16.mxu0 0
    %875 = vmatpush1.bf16.msra.mxu0 0
    %876 = vmatprep.subr.bf16.mxu0 0
    %877 = vmatpush1.bf16.msra.mxu0 0
    %878 = vmatprep.subr.bf16.mxu0 0
    %879 = vmatpush1.bf16.msra.mxu0 0
    %880 = vmatprep.subr.bf16.mxu0 0
    %881 = vmatpush1.bf16.msra.mxu0 0
    %882 = vmatprep.subr.bf16.mxu0 0
    %883 = vmatpush1.bf16.msra.mxu0 0
    %884 = vmatprep.subr.bf16.mxu0 0
    %885 = vmatpush1.bf16.msra.mxu0 0
    %886 = vmatprep.subr.bf16.mxu0 0
    %887 = vmatpush1.bf16.msra.mxu0 0
    %888 = vmatprep.subr.bf16.mxu0 0
    %889 = vmatpush1.bf16.msra.mxu0 0
    %890 = vmatprep.mubr.bf16.mxu0 0
    %891 = vmatmul.mubr.bf16.gmra.mrb[0].mxu0 %v815
    %v892 = vpop.f32.mrb[0].mxu0
    %v893 = vadd.f32 %v808, %v892
    %v894 = vpop.f32.mrb[0].mxu0
    %v895 = vadd.f32 %v810, %v894
    %v896 = vpop.f32.mrb[0].mxu0
    %v897 = vpop.f32.mrb[0].mxu0
    %898 = vdwg.mxu0
    %v899 = vadd.f32 %v852, %v111
    %v900 = vadd.f32 %v854, %v115
    %v901 = vadd.f32 %v893, %v119
    %v902 = vadd.f32 %v895, %v123
    %v903 = vxor.u32 %v899, 2147483648
    %v904 = vmul.f32 %v903, 1.442695
    %v905 = vpow.pop %v904
    %v906 = vadd.f32 %v905, 1.0
    %v907 = vrcp.pop %v906
    %v908 = vmul.f32 1.0, %v907
    %v909 = vxor.u32 %v900, 2147483648
    %v910 = vmul.f32 %v909, 1.442695
    %v911 = vpow.pop %v910
    %v912 = vadd.f32 %v911, 1.0
    %v913 = vrcp.pop %v912
    %v914 = vmul.f32 1.0, %v913
    %v915 = vtanh.pop %v901
    %v916 = vxor.u32 %v902, 2147483648
    %v917 = vmul.f32 %v916, 1.442695
    %v918 = vpow.pop %v917
    %v919 = vadd.f32 %v918, 1.0
    %v920 = vrcp.pop %v919
    %v921 = vmul.f32 1.0, %v920
    %v922 = vmul.f32 %v914, %v724
    %v923 = vmul.f32 %v908, %v915
    %v924 = vadd.f32 %v922, %v923
    %v925 = vtanh.pop %v924
    %v926 = vmul.f32 %v921, %v925
    %v927 = vpack.c.bf16 %v926, %v926
    %s928 = scalar_lea.vmem [#allocation10], 8
    %929 = vst [vmem:[%s928] sm:$0xf] %v927
    %s930 = scalar_lea.vmem [#allocation4], 12
    %v931 = vld [vmem:[%s930] sm:$0xf]
    %932 = vmatprep.subr.bf16.mxu0 %v229
    %933 = vmatpush1.bf16.msra.mxu0 %v228
    %934 = vmatprep.subr.bf16.mxu0 %v233
    %935 = vmatpush1.bf16.msra.mxu0 %v232
    %936 = vmatprep.subr.bf16.mxu0 %v237
    %937 = vmatpush1.bf16.msra.mxu0 %v236
    %938 = vmatprep.subr.bf16.mxu0 %v241
    %939 = vmatpush1.bf16.msra.mxu0 %v240
    %940 = vmatprep.subr.bf16.mxu0 %v245
    %941 = vmatpush1.bf16.msra.mxu0 %v244
    %942 = vmatprep.subr.bf16.mxu0 %v249
    %943 = vmatpush1.bf16.msra.mxu0 %v248
    %944 = vmatprep.subr.bf16.mxu0 %v253
    %945 = vmatpush1.bf16.msra.mxu0 %v252
    %946 = vmatprep.subr.bf16.mxu0 %v257
    %947 = vmatpush1.bf16.msra.mxu0 %v256
    %948 = vmatprep.subr.bf16.mxu0 0
    %949 = vmatpush1.bf16.msra.mxu0 0
    %950 = vmatprep.subr.bf16.mxu0 0
    %951 = vmatpush1.bf16.msra.mxu0 0
    %952 = vmatprep.subr.bf16.mxu0 0
    %953 = vmatpush1.bf16.msra.mxu0 0
    %954 = vmatprep.subr.bf16.mxu0 0
    %955 = vmatpush1.bf16.msra.mxu0 0
    %956 = vmatprep.subr.bf16.mxu0 0
    %957 = vmatpush1.bf16.msra.mxu0 0
    %958 = vmatprep.subr.bf16.mxu0 0
    %959 = vmatpush1.bf16.msra.mxu0 0
    %960 = vmatprep.subr.bf16.mxu0 0
    %961 = vmatpush1.bf16.msra.mxu0 0
    %962 = vmatprep.subr.bf16.mxu0 0
    %963 = vmatpush1.bf16.msra.mxu0 0
    %964 = vmatprep.mubr.bf16.mxu0 0
    %965 = vmatmul.mubr.bf16.gmra.mrb[0].mxu0 %v927
    %v966 = vpop.f32.mrb[0].mxu0
    %v967 = vadd.f32 0.0, %v966
    %v968 = vpop.f32.mrb[0].mxu0
    %v969 = vadd.f32 0.0, %v968
    %v970 = vpop.f32.mrb[0].mxu0
    %v971 = vpop.f32.mrb[0].mxu0
    %972 = vdwg.mxu0
    %973 = vmatprep.subr.bf16.mxu0 %v231
    %974 = vmatpush1.bf16.msra.mxu0 %v230
    %975 = vmatprep.subr.bf16.mxu0 %v235
    %976 = vmatpush1.bf16.msra.mxu0 %v234
    %977 = vmatprep.subr.bf16.mxu0 %v239
    %978 = vmatpush1.bf16.msra.mxu0 %v238
    %979 = vmatprep.subr.bf16.mxu0 %v243
    %980 = vmatpush1.bf16.msra.mxu0 %v242
    %981 = vmatprep.subr.bf16.mxu0 %v247
    %982 = vmatpush1.bf16.msra.mxu0 %v246
    %983 = vmatprep.subr.bf16.mxu0 %v251
    %984 = vmatpush1.bf16.msra.mxu0 %v250
    %985 = vmatprep.subr.bf16.mxu0 %v255
    %986 = vmatpush1.bf16.msra.mxu0 %v254
    %987 = vmatprep.subr.bf16.mxu0 %v259
    %988 = vmatpush1.bf16.msra.mxu0 %v258
    %989 = vmatprep.subr.bf16.mxu0 0
    %990 = vmatpush1.bf16.msra.mxu0 0
    %991 = vmatprep.subr.bf16.mxu0 0
    %992 = vmatpush1.bf16.msra.mxu0 0
    %993 = vmatprep.subr.bf16.mxu0 0
    %994 = vmatpush1.bf16.msra.mxu0 0
    %995 = vmatprep.subr.bf16.mxu0 0
    %996 = vmatpush1.bf16.msra.mxu0 0
    %997 = vmatprep.subr.bf16.mxu0 0
    %998 = vmatpush1.bf16.msra.mxu0 0
    %999 = vmatprep.subr.bf16.mxu0 0
    %1000 = vmatpush1.bf16.msra.mxu0 0
    %1001 = vmatprep.subr.bf16.mxu0 0
    %1002 = vmatpush1.bf16.msra.mxu0 0
    %1003 = vmatprep.subr.bf16.mxu0 0
    %1004 = vmatpush1.bf16.msra.mxu0 0
    %1005 = vmatprep.mubr.bf16.mxu0 0
    %1006 = vmatmul.mubr.bf16.gmra.mrb[0].mxu0 %v927
    %v1007 = vpop.f32.mrb[0].mxu0
    %v1008 = vadd.f32 0.0, %v1007
    %v1009 = vpop.f32.mrb[0].mxu0
    %v1010 = vadd.f32 0.0, %v1009
    %v1011 = vpop.f32.mrb[0].mxu0
    %v1012 = vpop.f32.mrb[0].mxu0
    %1013 = vdwg.mxu0
    %v1015 = vsel %vm414, %v931, 0
    %1017 = vmatprep.subr.bf16.mxu0 %v399
    %1018 = vmatpush1.bf16.msra.mxu0 %v398
    %1019 = vmatprep.subr.bf16.mxu0 %v403
    %1020 = vmatpush1.bf16.msra.mxu0 %v402
    %1021 = vmatprep.subr.bf16.mxu0 0
    %1022 = vmatpush1.bf16.msra.mxu0 0
    %1023 = vmatprep.subr.bf16.mxu0 0
    %1024 = vmatpush1.bf16.msra.mxu0 0
    %1025 = vmatprep.subr.bf16.mxu0 0
    %1026 = vmatpush1.bf16.msra.mxu0 0
    %1027 = vmatprep.subr.bf16.mxu0 0
    %1028 = vmatpush1.bf16.msra.mxu0 0
    %1029 = vmatprep.subr.bf16.mxu0 0
    %1030 = vmatpush1.bf16.msra.mxu0 0
    %1031 = vmatprep.subr.bf16.mxu0 0
    %1032 = vmatpush1.bf16.msra.mxu0 0
    %1033 = vmatprep.subr.bf16.mxu0 0
    %1034 = vmatpush1.bf16.msra.mxu0 0
    %1035 = vmatprep.subr.bf16.mxu0 0
    %1036 = vmatpush1.bf16.msra.mxu0 0
    %1037 = vmatprep.subr.bf16.mxu0 0
    %1038 = vmatpush1.bf16.msra.mxu0 0
    %1039 = vmatprep.subr.bf16.mxu0 0
    %1040 = vmatpush1.bf16.msra.mxu0 0
    %1041 = vmatprep.subr.bf16.mxu0 0
    %1042 = vmatpush1.bf16.msra.mxu0 0
    %1043 = vmatprep.subr.bf16.mxu0 0
    %1044 = vmatpush1.bf16.msra.mxu0 0
    %1045 = vmatprep.subr.bf16.mxu0 0
    %1046 = vmatpush1.bf16.msra.mxu0 0
    %1047 = vmatprep.subr.bf16.mxu0 0
    %1048 = vmatpush1.bf16.msra.mxu0 0
    %1049 = vmatprep.mubr.bf16.mxu0 0
    %1050 = vmatmul.mubr.bf16.gmra.mrb[0].mxu0 %v1015
    %v1051 = vpop.f32.mrb[0].mxu0
    %v1052 = vadd.f32 %v967, %v1051
    %v1053 = vpop.f32.mrb[0].mxu0
    %v1054 = vadd.f32 %v969, %v1053
    %v1055 = vpop.f32.mrb[0].mxu0
    %v1056 = vpop.f32.mrb[0].mxu0
    %1057 = vdwg.mxu0
    %1058 = vmatprep.subr.bf16.mxu0 %v401
    %1059 = vmatpush1.bf16.msra.mxu0 %v400
    %1060 = vmatprep.subr.bf16.mxu0 %v405
    %1061 = vmatpush1.bf16.msra.mxu0 %v404
    %1062 = vmatprep.subr.bf16.mxu0 0
    %1063 = vmatpush1.bf16.msra.mxu0 0
    %1064 = vmatprep.subr.bf16.mxu0 0
    %1065 = vmatpush1.bf16.msra.mxu0 0
    %1066 = vmatprep.subr.bf16.mxu0 0
    %1067 = vmatpush1.bf16.msra.mxu0 0
    %1068 = vmatprep.subr.bf16.mxu0 0
    %1069 = vmatpush1.bf16.msra.mxu0 0
    %1070 = vmatprep.subr.bf16.mxu0 0
    %1071 = vmatpush1.bf16.msra.mxu0 0
    %1072 = vmatprep.subr.bf16.mxu0 0
    %1073 = vmatpush1.bf16.msra.mxu0 0
    %1074 = vmatprep.subr.bf16.mxu0 0
    %1075 = vmatpush1.bf16.msra.mxu0 0
    %1076 = vmatprep.subr.bf16.mxu0 0
    %1077 = vmatpush1.bf16.msra.mxu0 0
    %1078 = vmatprep.subr.bf16.mxu0 0
    %1079 = vmatpush1.bf16.msra.mxu0 0
    %1080 = vmatprep.subr.bf16.mxu0 0
    %1081 = vmatpush1.bf16.msra.mxu0 0
    %1082 = vmatprep.subr.bf16.mxu0 0
    %1083 = vmatpush1.bf16.msra.mxu0 0
    %1084 = vmatprep.subr.bf16.mxu0 0
    %1085 = vmatpush1.bf16.msra.mxu0 0
    %1086 = vmatprep.subr.bf16.mxu0 0
    %1087 = vmatpush1.bf16.msra.mxu0 0
    %1088 = vmatprep.subr.bf16.mxu0 0
    %1089 = vmatpush1.bf16.msra.mxu0 0
    %1090 = vmatprep.mubr.bf16.mxu0 0
    %1091 = vmatmul.mubr.bf16.gmra.mrb[0].mxu0 %v1015
    %v1092 = vpop.f32.mrb[0].mxu0
    %v1093 = vadd.f32 %v1008, %v1092
    %v1094 = vpop.f32.mrb[0].mxu0
    %v1095 = vadd.f32 %v1010, %v1094
    %v1096 = vpop.f32.mrb[0].mxu0
    %v1097 = vpop.f32.mrb[0].mxu0
    %1098 = vdwg.mxu0
    %v1099 = vadd.f32 %v1052, %v111
    %v1100 = vadd.f32 %v1054, %v115
    %v1101 = vadd.f32 %v1093, %v119
    %v1102 = vadd.f32 %v1095, %v123
    %v1103 = vxor.u32 %v1099, 2147483648
    %v1104 = vmul.f32 %v1103, 1.442695
    %v1105 = vpow.pop %v1104
    %v1106 = vadd.f32 %v1105, 1.0
    %v1107 = vrcp.pop %v1106
    %v1108 = vmul.f32 1.0, %v1107
    %v1109 = vxor.u32 %v1100, 2147483648
    %v1110 = vmul.f32 %v1109, 1.442695
    %v1111 = vpow.pop %v1110
    %v1112 = vadd.f32 %v1111, 1.0
    %v1113 = vrcp.pop %v1112
    %v1114 = vmul.f32 1.0, %v1113
    %v1115 = vtanh.pop %v1101
    %v1116 = vxor.u32 %v1102, 2147483648
    %v1117 = vmul.f32 %v1116, 1.442695
    %v1118 = vpow.pop %v1117
    %v1119 = vadd.f32 %v1118, 1.0
    %v1120 = vrcp.pop %v1119
    %v1121 = vmul.f32 1.0, %v1120
    %v1122 = vmul.f32 %v1114, %v924
    %v1123 = vmul.f32 %v1108, %v1115
    %v1124 = vadd.f32 %v1122, %v1123
    %v1125 = vtanh.pop %v1124
    %v1126 = vmul.f32 %v1121, %v1125
    %v1127 = vpack.c.bf16 %v1126, %v1126
    %s1128 = scalar_lea.vmem [#allocation10], 12
    %1129 = vst [vmem:[%s1128] sm:$0xf] %v1127
    %s1130 = scalar_lea.vmem [#allocation4], 16
    %v1131 = vld [vmem:[%s1130] sm:$0xf]
    %1132 = vmatprep.subr.bf16.mxu0 %v229
    %1133 = vmatpush1.bf16.msra.mxu0 %v228
    %1134 = vmatprep.subr.bf16.mxu0 %v233
    %1135 = vmatpush1.bf16.msra.mxu0 %v232
    %1136 = vmatprep.subr.bf16.mxu0 %v237
    %1137 = vmatpush1.bf16.msra.mxu0 %v236
    %1138 = vmatprep.subr.bf16.mxu0 %v241
    %1139 = vmatpush1.bf16.msra.mxu0 %v240
    %1140 = vmatprep.subr.bf16.mxu0 %v245
    %1141 = vmatpush1.bf16.msra.mxu0 %v244
    %1142 = vmatprep.subr.bf16.mxu0 %v249
    %1143 = vmatpush1.bf16.msra.mxu0 %v248
    %1144 = vmatprep.subr.bf16.mxu0 %v253
    %1145 = vmatpush1.bf16.msra.mxu0 %v252
    %1146 = vmatprep.subr.bf16.mxu0 %v257
    %1147 = vmatpush1.bf16.msra.mxu0 %v256
    %1148 = vmatprep.subr.bf16.mxu0 0
    %1149 = vmatpush1.bf16.msra.mxu0 0
    %1150 = vmatprep.subr.bf16.mxu0 0
    %1151 = vmatpush1.bf16.msra.mxu0 0
    %1152 = vmatprep.subr.bf16.mxu0 0
    %1153 = vmatpush1.bf16.msra.mxu0 0
    %1154 = vmatprep.subr.bf16.mxu0 0
    %1155 = vmatpush1.bf16.msra.mxu0 0
    %1156 = vmatprep.subr.bf16.mxu0 0
    %1157 = vmatpush1.bf16.msra.mxu0 0
    %1158 = vmatprep.subr.bf16.mxu0 0
    %1159 = vmatpush1.bf16.msra.mxu0 0
    %1160 = vmatprep.subr.bf16.mxu0 0
    %1161 = vmatpush1.bf16.msra.mxu0 0
    %1162 = vmatprep.subr.bf16.mxu0 0
    %1163 = vmatpush1.bf16.msra.mxu0 0
    %1164 = vmatprep.mubr.bf16.mxu0 0
    %1165 = vmatmul.mubr.bf16.gmra.mrb[0].mxu0 %v1127
    %v1166 = vpop.f32.mrb[0].mxu0
    %v1167 = vadd.f32 0.0, %v1166
    %v1168 = vpop.f32.mrb[0].mxu0
    %v1169 = vadd.f32 0.0, %v1168
    %v1170 = vpop.f32.mrb[0].mxu0
    %v1171 = vpop.f32.mrb[0].mxu0
    %1172 = vdwg.mxu0
    %1173 = vmatprep.subr.bf16.mxu0 %v231
    %1174 = vmatpush1.bf16.msra.mxu0 %v230
    %1175 = vmatprep.subr.bf16.mxu0 %v235
    %1176 = vmatpush1.bf16.msra.mxu0 %v234
    %1177 = vmatprep.subr.bf16.mxu0 %v239
    %1178 = vmatpush1.bf16.msra.mxu0 %v238
    %1179 = vmatprep.subr.bf16.mxu0 %v243
    %1180 = vmatpush1.bf16.msra.mxu0 %v242
    %1181 = vmatprep.subr.bf16.mxu0 %v247
    %1182 = vmatpush1.bf16.msra.mxu0 %v246
    %1183 = vmatprep.subr.bf16.mxu0 %v251
    %1184 = vmatpush1.bf16.msra.mxu0 %v250
    %1185 = vmatprep.subr.bf16.mxu0 %v255
    %1186 = vmatpush1.bf16.msra.mxu0 %v254
    %1187 = vmatprep.subr.bf16.mxu0 %v259
    %1188 = vmatpush1.bf16.msra.mxu0 %v258
    %1189 = vmatprep.subr.bf16.mxu0 0
    %1190 = vmatpush1.bf16.msra.mxu0 0
    %1191 = vmatprep.subr.bf16.mxu0 0
    %1192 = vmatpush1.bf16.msra.mxu0 0
    %1193 = vmatprep.subr.bf16.mxu0 0
    %1194 = vmatpush1.bf16.msra.mxu0 0
    %1195 = vmatprep.subr.bf16.mxu0 0
    %1196 = vmatpush1.bf16.msra.mxu0 0
    %1197 = vmatprep.subr.bf16.mxu0 0
    %1198 = vmatpush1.bf16.msra.mxu0 0
    %1199 = vmatprep.subr.bf16.mxu0 0
    %1200 = vmatpush1.bf16.msra.mxu0 0
    %1201 = vmatprep.subr.bf16.mxu0 0
    %1202 = vmatpush1.bf16.msra.mxu0 0
    %1203 = vmatprep.subr.bf16.mxu0 0
    %1204 = vmatpush1.bf16.msra.mxu0 0
    %1205 = vmatprep.mubr.bf16.mxu0 0
    %1206 = vmatmul.mubr.bf16.gmra.mrb[0].mxu0 %v1127
    %v1207 = vpop.f32.mrb[0].mxu0
    %v1208 = vadd.f32 0.0, %v1207
    %v1209 = vpop.f32.mrb[0].mxu0
    %v1210 = vadd.f32 0.0, %v1209
    %v1211 = vpop.f32.mrb[0].mxu0
    %v1212 = vpop.f32.mrb[0].mxu0
    %1213 = vdwg.mxu0
    %v1215 = vsel %vm414, %v1131, 0
    %1217 = vmatprep.subr.bf16.mxu0 %v399
    %1218 = vmatpush1.bf16.msra.mxu0 %v398
    %1219 = vmatprep.subr.bf16.mxu0 %v403
    %1220 = vmatpush1.bf16.msra.mxu0 %v402
    %1221 = vmatprep.subr.bf16.mxu0 0
    %1222 = vmatpush1.bf16.msra.mxu0 0
    %1223 = vmatprep.subr.bf16.mxu0 0
    %1224 = vmatpush1.bf16.msra.mxu0 0
    %1225 = vmatprep.subr.bf16.mxu0 0
    %1226 = vmatpush1.bf16.msra.mxu0 0
    %1227 = vmatprep.subr.bf16.mxu0 0
    %1228 = vmatpush1.bf16.msra.mxu0 0
    %1229 = vmatprep.subr.bf16.mxu0 0
    %1230 = vmatpush1.bf16.msra.mxu0 0
    %1231 = vmatprep.subr.bf16.mxu0 0
    %1232 = vmatpush1.bf16.msra.mxu0 0
    %1233 = vmatprep.subr.bf16.mxu0 0
    %1234 = vmatpush1.bf16.msra.mxu0 0
    %1235 = vmatprep.subr.bf16.mxu0 0
    %1236 = vmatpush1.bf16.msra.mxu0 0
    %1237 = vmatprep.subr.bf16.mxu0 0
    %1238 = vmatpush1.bf16.msra.mxu0 0
    %1239 = vmatprep.subr.bf16.mxu0 0
    %1240 = vmatpush1.bf16.msra.mxu0 0
    %1241 = vmatprep.subr.bf16.mxu0 0
    %1242 = vmatpush1.bf16.msra.mxu0 0
    %1243 = vmatprep.subr.bf16.mxu0 0
    %1244 = vmatpush1.bf16.msra.mxu0 0
    %1245 = vmatprep.subr.bf16.mxu0 0
    %1246 = vmatpush1.bf16.msra.mxu0 0
    %1247 = vmatprep.subr.bf16.mxu0 0
    %1248 = vmatpush1.bf16.msra.mxu0 0
    %1249 = vmatprep.mubr.bf16.mxu0 0
    %1250 = vmatmul.mubr.bf16.gmra.mrb[0].mxu0 %v1215
    %v1251 = vpop.f32.mrb[0].mxu0
    %v1252 = vadd.f32 %v1167, %v1251
    %v1253 = vpop.f32.mrb[0].mxu0
    %v1254 = vadd.f32 %v1169, %v1253
    %v1255 = vpop.f32.mrb[0].mxu0
    %v1256 = vpop.f32.mrb[0].mxu0
    %1257 = vdwg.mxu0
    %1258 = vmatprep.subr.bf16.mxu0 %v401
    %1259 = vmatpush1.bf16.msra.mxu0 %v400
    %1260 = vmatprep.subr.bf16.mxu0 %v405
    %1261 = vmatpush1.bf16.msra.mxu0 %v404
    %1262 = vmatprep.subr.bf16.mxu0 0
    %1263 = vmatpush1.bf16.msra.mxu0 0
    %1264 = vmatprep.subr.bf16.mxu0 0
    %1265 = vmatpush1.bf16.msra.mxu0 0
    %1266 = vmatprep.subr.bf16.mxu0 0
    %1267 = vmatpush1.bf16.msra.mxu0 0
    %1268 = vmatprep.subr.bf16.mxu0 0
    %1269 = vmatpush1.bf16.msra.mxu0 0
    %1270 = vmatprep.subr.bf16.mxu0 0
    %1271 = vmatpush1.bf16.msra.mxu0 0
    %1272 = vmatprep.subr.bf16.mxu0 0
    %1273 = vmatpush1.bf16.msra.mxu0 0
    %1274 = vmatprep.subr.bf16.mxu0 0
    %1275 = vmatpush1.bf16.msra.mxu0 0
    %1276 = vmatprep.subr.bf16.mxu0 0
    %1277 = vmatpush1.bf16.msra.mxu0 0
    %1278 = vmatprep.subr.bf16.mxu0 0
    %1279 = vmatpush1.bf16.msra.mxu0 0
    %1280 = vmatprep.subr.bf16.mxu0 0
    %1281 = vmatpush1.bf16.msra.mxu0 0
    %1282 = vmatprep.subr.bf16.mxu0 0
    %1283 = vmatpush1.bf16.msra.mxu0 0
    %1284 = vmatprep.subr.bf16.mxu0 0
    %1285 = vmatpush1.bf16.msra.mxu0 0
    %1286 = vmatprep.subr.bf16.mxu0 0
    %1287 = vmatpush1.bf16.msra.mxu0 0
    %1288 = vmatprep.subr.bf16.mxu0 0
    %1289 = vmatpush1.bf16.msra.mxu0 0
    %1290 = vmatprep.mubr.bf16.mxu0 0
    %1291 = vmatmul.mubr.bf16.gmra.mrb[0].mxu0 %v1215
    %v1292 = vpop.f32.mrb[0].mxu0
    %v1293 = vadd.f32 %v1208, %v1292
    %v1294 = vpop.f32.mrb[0].mxu0
    %v1295 = vadd.f32 %v1210, %v1294
    %v1296 = vpop.f32.mrb[0].mxu0
    %v1297 = vpop.f32.mrb[0].mxu0
    %1298 = vdwg.mxu0
    %v1299 = vadd.f32 %v1252, %v111
    %v1300 = vadd.f32 %v1254, %v115
    %v1301 = vadd.f32 %v1293, %v119
    %v1302 = vadd.f32 %v1295, %v123
    %v1303 = vxor.u32 %v1299, 2147483648
    %v1304 = vmul.f32 %v1303, 1.442695
    %v1305 = vpow.pop %v1304
    %v1306 = vadd.f32 %v1305, 1.0
    %v1307 = vrcp.pop %v1306
    %v1308 = vmul.f32 1.0, %v1307
    %v1309 = vxor.u32 %v1300, 2147483648
    %v1310 = vmul.f32 %v1309, 1.442695
    %v1311 = vpow.pop %v1310
    %v1312 = vadd.f32 %v1311, 1.0
    %v1313 = vrcp.pop %v1312
    %v1314 = vmul.f32 1.0, %v1313
    %v1315 = vtanh.pop %v1301
    %v1316 = vxor.u32 %v1302, 2147483648
    %v1317 = vmul.f32 %v1316, 1.442695
    %v1318 = vpow.pop %v1317
    %v1319 = vadd.f32 %v1318, 1.0
    %v1320 = vrcp.pop %v1319
    %v1321 = vmul.f32 1.0, %v1320
    %v1322 = vmul.f32 %v1314, %v1124
    %v1323 = vmul.f32 %v1308, %v1315
    %v1324 = vadd.f32 %v1322, %v1323
    %v1325 = vtanh.pop %v1324
    %v1326 = vmul.f32 %v1321, %v1325
    %v1327 = vpack.c.bf16 %v1326, %v1326
    %s1328 = scalar_lea.vmem [#allocation10], 16
    %1329 = vst [vmem:[%s1328] sm:$0xf] %v1327
    %s1330 = scalar_lea.vmem [#allocation4], 20
    %v1331 = vld [vmem:[%s1330] sm:$0xf]
    %1332 = vmatprep.subr.bf16.mxu0 %v229
    %1333 = vmatpush1.bf16.msra.mxu0 %v228
    %1334 = vmatprep.subr.bf16.mxu0 %v233
    %1335 = vmatpush1.bf16.msra.mxu0 %v232
    %1336 = vmatprep.subr.bf16.mxu0 %v237
    %1337 = vmatpush1.bf16.msra.mxu0 %v236
    %1338 = vmatprep.subr.bf16.mxu0 %v241
    %1339 = vmatpush1.bf16.msra.mxu0 %v240
    %1340 = vmatprep.subr.bf16.mxu0 %v245
    %1341 = vmatpush1.bf16.msra.mxu0 %v244
    %1342 = vmatprep.subr.bf16.mxu0 %v249
    %1343 = vmatpush1.bf16.msra.mxu0 %v248
    %1344 = vmatprep.subr.bf16.mxu0 %v253
    %1345 = vmatpush1.bf16.msra.mxu0 %v252
    %1346 = vmatprep.subr.bf16.mxu0 %v257
    %1347 = vmatpush1.bf16.msra.mxu0 %v256
    %1348 = vmatprep.subr.bf16.mxu0 0
    %1349 = vmatpush1.bf16.msra.mxu0 0
    %1350 = vmatprep.subr.bf16.mxu0 0
    %1351 = vmatpush1.bf16.msra.mxu0 0
    %1352 = vmatprep.subr.bf16.mxu0 0
    %1353 = vmatpush1.bf16.msra.mxu0 0
    %1354 = vmatprep.subr.bf16.mxu0 0
    %1355 = vmatpush1.bf16.msra.mxu0 0
    %1356 = vmatprep.subr.bf16.mxu0 0
    %1357 = vmatpush1.bf16.msra.mxu0 0
    %1358 = vmatprep.subr.bf16.mxu0 0
    %1359 = vmatpush1.bf16.msra.mxu0 0
    %1360 = vmatprep.subr.bf16.mxu0 0
    %1361 = vmatpush1.bf16.msra.mxu0 0
    %1362 = vmatprep.subr.bf16.mxu0 0
    %1363 = vmatpush1.bf16.msra.mxu0 0
    %1364 = vmatprep.mubr.bf16.mxu0 0
    %1365 = vmatmul.mubr.bf16.gmra.mrb[0].mxu0 %v1327
    %v1366 = vpop.f32.mrb[0].mxu0
    %v1367 = vadd.f32 0.0, %v1366
    %v1368 = vpop.f32.mrb[0].mxu0
    %v1369 = vadd.f32 0.0, %v1368
    %v1370 = vpop.f32.mrb[0].mxu0
    %v1371 = vpop.f32.mrb[0].mxu0
    %1372 = vdwg.mxu0
    %1373 = vmatprep.subr.bf16.mxu0 %v231
    %1374 = vmatpush1.bf16.msra.mxu0 %v230
    %1375 = vmatprep.subr.bf16.mxu0 %v235
    %1376 = vmatpush1.bf16.msra.mxu0 %v234
    %1377 = vmatprep.subr.bf16.mxu0 %v239
    %1378 = vmatpush1.bf16.msra.mxu0 %v238
    %1379 = vmatprep.subr.bf16.mxu0 %v243
    %1380 = vmatpush1.bf16.msra.mxu0 %v242
    %1381 = vmatprep.subr.bf16.mxu0 %v247
    %1382 = vmatpush1.bf16.msra.mxu0 %v246
    %1383 = vmatprep.subr.bf16.mxu0 %v251
    %1384 = vmatpush1.bf16.msra.mxu0 %v250
    %1385 = vmatprep.subr.bf16.mxu0 %v255
    %1386 = vmatpush1.bf16.msra.mxu0 %v254
    %1387 = vmatprep.subr.bf16.mxu0 %v259
    %1388 = vmatpush1.bf16.msra.mxu0 %v258
    %1389 = vmatprep.subr.bf16.mxu0 0
    %1390 = vmatpush1.bf16.msra.mxu0 0
    %1391 = vmatprep.subr.bf16.mxu0 0
    %1392 = vmatpush1.bf16.msra.mxu0 0
    %1393 = vmatprep.subr.bf16.mxu0 0
    %1394 = vmatpush1.bf16.msra.mxu0 0
    %1395 = vmatprep.subr.bf16.mxu0 0
    %1396 = vmatpush1.bf16.msra.mxu0 0
    %1397 = vmatprep.subr.bf16.mxu0 0
    %1398 = vmatpush1.bf16.msra.mxu0 0
    %1399 = vmatprep.subr.bf16.mxu0 0
    %1400 = vmatpush1.bf16.msra.mxu0 0
    %1401 = vmatprep.subr.bf16.mxu0 0
    %1402 = vmatpush1.bf16.msra.mxu0 0
    %1403 = vmatprep.subr.bf16.mxu0 0
    %1404 = vmatpush1.bf16.msra.mxu0 0
    %1405 = vmatprep.mubr.bf16.mxu0 0
    %1406 = vmatmul.mubr.bf16.gmra.mrb[0].mxu0 %v1327
    %v1407 = vpop.f32.mrb[0].mxu0
    %v1408 = vadd.f32 0.0, %v1407
    %v1409 = vpop.f32.mrb[0].mxu0
    %v1410 = vadd.f32 0.0, %v1409
    %v1411 = vpop.f32.mrb[0].mxu0
    %v1412 = vpop.f32.mrb[0].mxu0
    %1413 = vdwg.mxu0
    %v1415 = vsel %vm414, %v1331, 0
    %1417 = vmatprep.subr.bf16.mxu0 %v399
    %1418 = vmatpush1.bf16.msra.mxu0 %v398
    %1419 = vmatprep.subr.bf16.mxu0 %v403
    %1420 = vmatpush1.bf16.msra.mxu0 %v402
    %1421 = vmatprep.subr.bf16.mxu0 0
    %1422 = vmatpush1.bf16.msra.mxu0 0
    %1423 = vmatprep.subr.bf16.mxu0 0
    %1424 = vmatpush1.bf16.msra.mxu0 0
    %1425 = vmatprep.subr.bf16.mxu0 0
    %1426 = vmatpush1.bf16.msra.mxu0 0
    %1427 = vmatprep.subr.bf16.mxu0 0
    %1428 = vmatpush1.bf16.msra.mxu0 0
    %1429 = vmatprep.subr.bf16.mxu0 0
    %1430 = vmatpush1.bf16.msra.mxu0 0
    %1431 = vmatprep.subr.bf16.mxu0 0
    %1432 = vmatpush1.bf16.msra.mxu0 0
    %1433 = vmatprep.subr.bf16.mxu0 0
    %1434 = vmatpush1.bf16.msra.mxu0 0
    %1435 = vmatprep.subr.bf16.mxu0 0
    %1436 = vmatpush1.bf16.msra.mxu0 0
    %1437 = vmatprep.subr.bf16.mxu0 0
    %1438 = vmatpush1.bf16.msra.mxu0 0
    %1439 = vmatprep.subr.bf16.mxu0 0
    %1440 = vmatpush1.bf16.msra.mxu0 0
    %1441 = vmatprep.subr.bf16.mxu0 0
    %1442 = vmatpush1.bf16.msra.mxu0 0
    %1443 = vmatprep.subr.bf16.mxu0 0
    %1444 = vmatpush1.bf16.msra.mxu0 0
    %1445 = vmatprep.subr.bf16.mxu0 0
    %1446 = vmatpush1.bf16.msra.mxu0 0
    %1447 = vmatprep.subr.bf16.mxu0 0
    %1448 = vmatpush1.bf16.msra.mxu0 0
    %1449 = vmatprep.mubr.bf16.mxu0 0
    %1450 = vmatmul.mubr.bf16.gmra.mrb[0].mxu0 %v1415
    %v1451 = vpop.f32.mrb[0].mxu0
    %v1452 = vadd.f32 %v1367, %v1451
    %v1453 = vpop.f32.mrb[0].mxu0
    %v1454 = vadd.f32 %v1369, %v1453
    %v1455 = vpop.f32.mrb[0].mxu0
    %v1456 = vpop.f32.mrb[0].mxu0
    %1457 = vdwg.mxu0
    %1458 = vmatprep.subr.bf16.mxu0 %v401
    %1459 = vmatpush1.bf16.msra.mxu0 %v400
    %1460 = vmatprep.subr.bf16.mxu0 %v405
    %1461 = vmatpush1.bf16.msra.mxu0 %v404
    %1462 = vmatprep.subr.bf16.mxu0 0
    %1463 = vmatpush1.bf16.msra.mxu0 0
    %1464 = vmatprep.subr.bf16.mxu0 0
    %1465 = vmatpush1.bf16.msra.mxu0 0
    %1466 = vmatprep.subr.bf16.mxu0 0
    %1467 = vmatpush1.bf16.msra.mxu0 0
    %1468 = vmatprep.subr.bf16.mxu0 0
    %1469 = vmatpush1.bf16.msra.mxu0 0
    %1470 = vmatprep.subr.bf16.mxu0 0
    %1471 = vmatpush1.bf16.msra.mxu0 0
    %1472 = vmatprep.subr.bf16.mxu0 0
    %1473 = vmatpush1.bf16.msra.mxu0 0
    %1474 = vmatprep.subr.bf16.mxu0 0
    %1475 = vmatpush1.bf16.msra.mxu0 0
    %1476 = vmatprep.subr.bf16.mxu0 0
    %1477 = vmatpush1.bf16.msra.mxu0 0
    %1478 = vmatprep.subr.bf16.mxu0 0
    %1479 = vmatpush1.bf16.msra.mxu0 0
    %1480 = vmatprep.subr.bf16.mxu0 0
    %1481 = vmatpush1.bf16.msra.mxu0 0
    %1482 = vmatprep.subr.bf16.mxu0 0
    %1483 = vmatpush1.bf16.msra.mxu0 0
    %1484 = vmatprep.subr.bf16.mxu0 0
    %1485 = vmatpush1.bf16.msra.mxu0 0
    %1486 = vmatprep.subr.bf16.mxu0 0
    %1487 = vmatpush1.bf16.msra.mxu0 0
    %1488 = vmatprep.subr.bf16.mxu0 0
    %1489 = vmatpush1.bf16.msra.mxu0 0
    %1490 = vmatprep.mubr.bf16.mxu0 0
    %1491 = vmatmul.mubr.bf16.gmra.mrb[0].mxu0 %v1415
    %v1492 = vpop.f32.mrb[0].mxu0
    %v1493 = vadd.f32 %v1408, %v1492
    %v1494 = vpop.f32.mrb[0].mxu0
    %v1495 = vadd.f32 %v1410, %v1494
    %v1496 = vpop.f32.mrb[0].mxu0
    %v1497 = vpop.f32.mrb[0].mxu0
    %1498 = vdwg.mxu0
    %v1499 = vadd.f32 %v1452, %v111
    %v1500 = vadd.f32 %v1454, %v115
    %v1501 = vadd.f32 %v1493, %v119
    %v1502 = vadd.f32 %v1495, %v123
    %v1503 = vxor.u32 %v1499, 2147483648
    %v1504 = vmul.f32 %v1503, 1.442695
    %v1505 = vpow.pop %v1504
    %v1506 = vadd.f32 %v1505, 1.0
    %v1507 = vrcp.pop %v1506
    %v1508 = vmul.f32 1.0, %v1507
    %v1509 = vxor.u32 %v1500, 2147483648
    %v1510 = vmul.f32 %v1509, 1.442695
    %v1511 = vpow.pop %v1510
    %v1512 = vadd.f32 %v1511, 1.0
    %v1513 = vrcp.pop %v1512
    %v1514 = vmul.f32 1.0, %v1513
    %v1515 = vtanh.pop %v1501
    %v1516 = vxor.u32 %v1502, 2147483648
    %v1517 = vmul.f32 %v1516, 1.442695
    %v1518 = vpow.pop %v1517
    %v1519 = vadd.f32 %v1518, 1.0
    %v1520 = vrcp.pop %v1519
    %v1521 = vmul.f32 1.0, %v1520
    %v1522 = vmul.f32 %v1514, %v1324
    %v1523 = vmul.f32 %v1508, %v1515
    %v1524 = vadd.f32 %v1522, %v1523
    %v1525 = vtanh.pop %v1524
    %v1526 = vmul.f32 %v1521, %v1525
    %v1527 = vpack.c.bf16 %v1526, %v1526
    %s1528 = scalar_lea.vmem [#allocation10], 20
    %1529 = vst [vmem:[%s1528] sm:$0xf] %v1527
    %s1530 = scalar_lea.vmem [#allocation4], 24
    %v1531 = vld [vmem:[%s1530] sm:$0xf]
    %1532 = vmatprep.subr.bf16.mxu0 %v229
    %1533 = vmatpush1.bf16.msra.mxu0 %v228
    %1534 = vmatprep.subr.bf16.mxu0 %v233
    %1535 = vmatpush1.bf16.msra.mxu0 %v232
    %1536 = vmatprep.subr.bf16.mxu0 %v237
    %1537 = vmatpush1.bf16.msra.mxu0 %v236
    %1538 = vmatprep.subr.bf16.mxu0 %v241
    %1539 = vmatpush1.bf16.msra.mxu0 %v240
    %1540 = vmatprep.subr.bf16.mxu0 %v245
    %1541 = vmatpush1.bf16.msra.mxu0 %v244
    %1542 = vmatprep.subr.bf16.mxu0 %v249
    %1543 = vmatpush1.bf16.msra.mxu0 %v248
    %1544 = vmatprep.subr.bf16.mxu0 %v253
    %1545 = vmatpush1.bf16.msra.mxu0 %v252
    %1546 = vmatprep.subr.bf16.mxu0 %v257
    %1547 = vmatpush1.bf16.msra.mxu0 %v256
    %1548 = vmatprep.subr.bf16.mxu0 0
    %1549 = vmatpush1.bf16.msra.mxu0 0
    %1550 = vmatprep.subr.bf16.mxu0 0
    %1551 = vmatpush1.bf16.msra.mxu0 0
    %1552 = vmatprep.subr.bf16.mxu0 0
    %1553 = vmatpush1.bf16.msra.mxu0 0
    %1554 = vmatprep.subr.bf16.mxu0 0
    %1555 = vmatpush1.bf16.msra.mxu0 0
    %1556 = vmatprep.subr.bf16.mxu0 0
    %1557 = vmatpush1.bf16.msra.mxu0 0
    %1558 = vmatprep.subr.bf16.mxu0 0
    %1559 = vmatpush1.bf16.msra.mxu0 0
    %1560 = vmatprep.subr.bf16.mxu0 0
    %1561 = vmatpush1.bf16.msra.mxu0 0
    %1562 = vmatprep.subr.bf16.mxu0 0
    %1563 = vmatpush1.bf16.msra.mxu0 0
    %1564 = vmatprep.mubr.bf16.mxu0 0
    %1565 = vmatmul.mubr.bf16.gmra.mrb[0].mxu0 %v1527
    %v1566 = vpop.f32.mrb[0].mxu0
    %v1567 = vadd.f32 0.0, %v1566
    %v1568 = vpop.f32.mrb[0].mxu0
    %v1569 = vadd.f32 0.0, %v1568
    %v1570 = vpop.f32.mrb[0].mxu0
    %v1571 = vpop.f32.mrb[0].mxu0
    %1572 = vdwg.mxu0
    %1573 = vmatprep.subr.bf16.mxu0 %v231
    %1574 = vmatpush1.bf16.msra.mxu0 %v230
    %1575 = vmatprep.subr.bf16.mxu0 %v235
    %1576 = vmatpush1.bf16.msra.mxu0 %v234
    %1577 = vmatprep.subr.bf16.mxu0 %v239
    %1578 = vmatpush1.bf16.msra.mxu0 %v238
    %1579 = vmatprep.subr.bf16.mxu0 %v243
    %1580 = vmatpush1.bf16.msra.mxu0 %v242
    %1581 = vmatprep.subr.bf16.mxu0 %v247
    %1582 = vmatpush1.bf16.msra.mxu0 %v246
    %1583 = vmatprep.subr.bf16.mxu0 %v251
    %1584 = vmatpush1.bf16.msra.mxu0 %v250
    %1585 = vmatprep.subr.bf16.mxu0 %v255
    %1586 = vmatpush1.bf16.msra.mxu0 %v254
    %1587 = vmatprep.subr.bf16.mxu0 %v259
    %1588 = vmatpush1.bf16.msra.mxu0 %v258
    %1589 = vmatprep.subr.bf16.mxu0 0
    %1590 = vmatpush1.bf16.msra.mxu0 0
    %1591 = vmatprep.subr.bf16.mxu0 0
    %1592 = vmatpush1.bf16.msra.mxu0 0
    %1593 = vmatprep.subr.bf16.mxu0 0
    %1594 = vmatpush1.bf16.msra.mxu0 0
    %1595 = vmatprep.subr.bf16.mxu0 0
    %1596 = vmatpush1.bf16.msra.mxu0 0
    %1597 = vmatprep.subr.bf16.mxu0 0
    %1598 = vmatpush1.bf16.msra.mxu0 0
    %1599 = vmatprep.subr.bf16.mxu0 0
    %1600 = vmatpush1.bf16.msra.mxu0 0
    %1601 = vmatprep.subr.bf16.mxu0 0
    %1602 = vmatpush1.bf16.msra.mxu0 0
    %1603 = vmatprep.subr.bf16.mxu0 0
    %1604 = vmatpush1.bf16.msra.mxu0 0
    %1605 = vmatprep.mubr.bf16.mxu0 0
    %1606 = vmatmul.mubr.bf16.gmra.mrb[0].mxu0 %v1527
    %v1607 = vpop.f32.mrb[0].mxu0
    %v1608 = vadd.f32 0.0, %v1607
    %v1609 = vpop.f32.mrb[0].mxu0
    %v1610 = vadd.f32 0.0, %v1609
    %v1611 = vpop.f32.mrb[0].mxu0
    %v1612 = vpop.f32.mrb[0].mxu0
    %1613 = vdwg.mxu0
    %v1615 = vsel %vm414, %v1531, 0
    %1617 = vmatprep.subr.bf16.mxu0 %v399
    %1618 = vmatpush1.bf16.msra.mxu0 %v398
    %1619 = vmatprep.subr.bf16.mxu0 %v403
    %1620 = vmatpush1.bf16.msra.mxu0 %v402
    %1621 = vmatprep.subr.bf16.mxu0 0
    %1622 = vmatpush1.bf16.msra.mxu0 0
    %1623 = vmatprep.subr.bf16.mxu0 0
    %1624 = vmatpush1.bf16.msra.mxu0 0
    %1625 = vmatprep.subr.bf16.mxu0 0
    %1626 = vmatpush1.bf16.msra.mxu0 0
    %1627 = vmatprep.subr.bf16.mxu0 0
    %1628 = vmatpush1.bf16.msra.mxu0 0
    %1629 = vmatprep.subr.bf16.mxu0 0
    %1630 = vmatpush1.bf16.msra.mxu0 0
    %1631 = vmatprep.subr.bf16.mxu0 0
    %1632 = vmatpush1.bf16.msra.mxu0 0
    %1633 = vmatprep.subr.bf16.mxu0 0
    %1634 = vmatpush1.bf16.msra.mxu0 0
    %1635 = vmatprep.subr.bf16.mxu0 0
    %1636 = vmatpush1.bf16.msra.mxu0 0
    %1637 = vmatprep.subr.bf16.mxu0 0
    %1638 = vmatpush1.bf16.msra.mxu0 0
    %1639 = vmatprep.subr.bf16.mxu0 0
    %1640 = vmatpush1.bf16.msra.mxu0 0
    %1641 = vmatprep.subr.bf16.mxu0 0
    %1642 = vmatpush1.bf16.msra.mxu0 0
    %1643 = vmatprep.subr.bf16.mxu0 0
    %1644 = vmatpush1.bf16.msra.mxu0 0
    %1645 = vmatprep.subr.bf16.mxu0 0
    %1646 = vmatpush1.bf16.msra.mxu0 0
    %1647 = vmatprep.subr.bf16.mxu0 0
    %1648 = vmatpush1.bf16.msra.mxu0 0
    %1649 = vmatprep.mubr.bf16.mxu0 0
    %1650 = vmatmul.mubr.bf16.gmra.mrb[0].mxu0 %v1615
    %v1651 = vpop.f32.mrb[0].mxu0
    %v1652 = vadd.f32 %v1567, %v1651
    %v1653 = vpop.f32.mrb[0].mxu0
    %v1654 = vadd.f32 %v1569, %v1653
    %v1655 = vpop.f32.mrb[0].mxu0
    %v1656 = vpop.f32.mrb[0].mxu0
    %1657 = vdwg.mxu0
    %1658 = vmatprep.subr.bf16.mxu0 %v401
    %1659 = vmatpush1.bf16.msra.mxu0 %v400
    %1660 = vmatprep.subr.bf16.mxu0 %v405
    %1661 = vmatpush1.bf16.msra.mxu0 %v404
    %1662 = vmatprep.subr.bf16.mxu0 0
    %1663 = vmatpush1.bf16.msra.mxu0 0
    %1664 = vmatprep.subr.bf16.mxu0 0
    %1665 = vmatpush1.bf16.msra.mxu0 0
    %1666 = vmatprep.subr.bf16.mxu0 0
    %1667 = vmatpush1.bf16.msra.mxu0 0
    %1668 = vmatprep.subr.bf16.mxu0 0
    %1669 = vmatpush1.bf16.msra.mxu0 0
    %1670 = vmatprep.subr.bf16.mxu0 0
    %1671 = vmatpush1.bf16.msra.mxu0 0
    %1672 = vmatprep.subr.bf16.mxu0 0
    %1673 = vmatpush1.bf16.msra.mxu0 0
    %1674 = vmatprep.subr.bf16.mxu0 0
    %1675 = vmatpush1.bf16.msra.mxu0 0
    %1676 = vmatprep.subr.bf16.mxu0 0
    %1677 = vmatpush1.bf16.msra.mxu0 0
    %1678 = vmatprep.subr.bf16.mxu0 0
    %1679 = vmatpush1.bf16.msra.mxu0 0
    %1680 = vmatprep.subr.bf16.mxu0 0
    %1681 = vmatpush1.bf16.msra.mxu0 0
    %1682 = vmatprep.subr.bf16.mxu0 0
    %1683 = vmatpush1.bf16.msra.mxu0 0
    %1684 = vmatprep.subr.bf16.mxu0 0
    %1685 = vmatpush1.bf16.msra.mxu0 0
    %1686 = vmatprep.subr.bf16.mxu0 0
    %1687 = vmatpush1.bf16.msra.mxu0 0
    %1688 = vmatprep.subr.bf16.mxu0 0
    %1689 = vmatpush1.bf16.msra.mxu0 0
    %1690 = vmatprep.mubr.bf16.mxu0 0
    %1691 = vmatmul.mubr.bf16.gmra.mrb[0].mxu0 %v1615
    %v1692 = vpop.f32.mrb[0].mxu0
    %v1693 = vadd.f32 %v1608, %v1692
    %v1694 = vpop.f32.mrb[0].mxu0
    %v1695 = vadd.f32 %v1610, %v1694
    %v1696 = vpop.f32.mrb[0].mxu0
    %v1697 = vpop.f32.mrb[0].mxu0
    %1698 = vdwg.mxu0
    %v1699 = vadd.f32 %v1652, %v111
    %v1700 = vadd.f32 %v1654, %v115
    %v1701 = vadd.f32 %v1693, %v119
    %v1702 = vadd.f32 %v1695, %v123
    %v1703 = vxor.u32 %v1699, 2147483648
    %v1704 = vmul.f32 %v1703, 1.442695
    %v1705 = vpow.pop %v1704
    %v1706 = vadd.f32 %v1705, 1.0
    %v1707 = vrcp.pop %v1706
    %v1708 = vmul.f32 1.0, %v1707
    %v1709 = vxor.u32 %v1700, 2147483648
    %v1710 = vmul.f32 %v1709, 1.442695
    %v1711 = vpow.pop %v1710
    %v1712 = vadd.f32 %v1711, 1.0
    %v1713 = vrcp.pop %v1712
    %v1714 = vmul.f32 1.0, %v1713
    %v1715 = vtanh.pop %v1701
    %v1716 = vxor.u32 %v1702, 2147483648
    %v1717 = vmul.f32 %v1716, 1.442695
    %v1718 = vpow.pop %v1717
    %v1719 = vadd.f32 %v1718, 1.0
    %v1720 = vrcp.pop %v1719
    %v1721 = vmul.f32 1.0, %v1720
    %v1722 = vmul.f32 %v1714, %v1524
    %v1723 = vmul.f32 %v1708, %v1715
    %v1724 = vadd.f32 %v1722, %v1723
    %v1725 = vtanh.pop %v1724
    %v1726 = vmul.f32 %v1721, %v1725
    %v1727 = vpack.c.bf16 %v1726, %v1726
    %s1728 = scalar_lea.vmem [#allocation10], 24
    %1729 = vst [vmem:[%s1728] sm:$0xf] %v1727
    %s1730 = scalar_lea.vmem [#allocation4], 28
    %v1731 = vld [vmem:[%s1730] sm:$0xf]
    %1732 = vmatprep.subr.bf16.mxu0 %v229
    %1733 = vmatpush1.bf16.msra.mxu0 %v228
    %1734 = vmatprep.subr.bf16.mxu0 %v233
    %1735 = vmatpush1.bf16.msra.mxu0 %v232
    %1736 = vmatprep.subr.bf16.mxu0 %v237
    %1737 = vmatpush1.bf16.msra.mxu0 %v236
    %1738 = vmatprep.subr.bf16.mxu0 %v241
    %1739 = vmatpush1.bf16.msra.mxu0 %v240
    %1740 = vmatprep.subr.bf16.mxu0 %v245
    %1741 = vmatpush1.bf16.msra.mxu0 %v244
    %1742 = vmatprep.subr.bf16.mxu0 %v249
    %1743 = vmatpush1.bf16.msra.mxu0 %v248
    %1744 = vmatprep.subr.bf16.mxu0 %v253
    %1745 = vmatpush1.bf16.msra.mxu0 %v252
    %1746 = vmatprep.subr.bf16.mxu0 %v257
    %1747 = vmatpush1.bf16.msra.mxu0 %v256
    %1748 = vmatprep.subr.bf16.mxu0 0
    %1749 = vmatpush1.bf16.msra.mxu0 0
    %1750 = vmatprep.subr.bf16.mxu0 0
    %1751 = vmatpush1.bf16.msra.mxu0 0
    %1752 = vmatprep.subr.bf16.mxu0 0
    %1753 = vmatpush1.bf16.msra.mxu0 0
    %1754 = vmatprep.subr.bf16.mxu0 0
    %1755 = vmatpush1.bf16.msra.mxu0 0
    %1756 = vmatprep.subr.bf16.mxu0 0
    %1757 = vmatpush1.bf16.msra.mxu0 0
    %1758 = vmatprep.subr.bf16.mxu0 0
    %1759 = vmatpush1.bf16.msra.mxu0 0
    %1760 = vmatprep.subr.bf16.mxu0 0
    %1761 = vmatpush1.bf16.msra.mxu0 0
    %1762 = vmatprep.subr.bf16.mxu0 0
    %1763 = vmatpush1.bf16.msra.mxu0 0
    %1764 = vmatprep.mubr.bf16.mxu0 0
    %1765 = vmatmul.mubr.bf16.gmra.mrb[0].mxu0 %v1727
    %v1766 = vpop.f32.mrb[0].mxu0
    %v1767 = vadd.f32 0.0, %v1766
    %v1768 = vpop.f32.mrb[0].mxu0
    %v1769 = vadd.f32 0.0, %v1768
    %v1770 = vpop.f32.mrb[0].mxu0
    %v1771 = vpop.f32.mrb[0].mxu0
    %1772 = vdwg.mxu0
    %1773 = vmatprep.subr.bf16.mxu0 %v231
    %1774 = vmatpush1.bf16.msra.mxu0 %v230
    %1775 = vmatprep.subr.bf16.mxu0 %v235
    %1776 = vmatpush1.bf16.msra.mxu0 %v234
    %1777 = vmatprep.subr.bf16.mxu0 %v239
    %1778 = vmatpush1.bf16.msra.mxu0 %v238
    %1779 = vmatprep.subr.bf16.mxu0 %v243
    %1780 = vmatpush1.bf16.msra.mxu0 %v242
    %1781 = vmatprep.subr.bf16.mxu0 %v247
    %1782 = vmatpush1.bf16.msra.mxu0 %v246
    %1783 = vmatprep.subr.bf16.mxu0 %v251
    %1784 = vmatpush1.bf16.msra.mxu0 %v250
    %1785 = vmatprep.subr.bf16.mxu0 %v255
    %1786 = vmatpush1.bf16.msra.mxu0 %v254
    %1787 = vmatprep.subr.bf16.mxu0 %v259
    %1788 = vmatpush1.bf16.msra.mxu0 %v258
    %1789 = vmatprep.subr.bf16.mxu0 0
    %1790 = vmatpush1.bf16.msra.mxu0 0
    %1791 = vmatprep.subr.bf16.mxu0 0
    %1792 = vmatpush1.bf16.msra.mxu0 0
    %1793 = vmatprep.subr.bf16.mxu0 0
    %1794 = vmatpush1.bf16.msra.mxu0 0
    %1795 = vmatprep.subr.bf16.mxu0 0
    %1796 = vmatpush1.bf16.msra.mxu0 0
    %1797 = vmatprep.subr.bf16.mxu0 0
    %1798 = vmatpush1.bf16.msra.mxu0 0
    %1799 = vmatprep.subr.bf16.mxu0 0
    %1800 = vmatpush1.bf16.msra.mxu0 0
    %1801 = vmatprep.subr.bf16.mxu0 0
    %1802 = vmatpush1.bf16.msra.mxu0 0
    %1803 = vmatprep.subr.bf16.mxu0 0
    %1804 = vmatpush1.bf16.msra.mxu0 0
    %1805 = vmatprep.mubr.bf16.mxu0 0
    %1806 = vmatmul.mubr.bf16.gmra.mrb[0].mxu0 %v1727
    %v1807 = vpop.f32.mrb[0].mxu0
    %v1808 = vadd.f32 0.0, %v1807
    %v1809 = vpop.f32.mrb[0].mxu0
    %v1810 = vadd.f32 0.0, %v1809
    %v1811 = vpop.f32.mrb[0].mxu0
    %v1812 = vpop.f32.mrb[0].mxu0
    %1813 = vdwg.mxu0
    %v1815 = vsel %vm414, %v1731, 0
    %1817 = vmatprep.subr.bf16.mxu0 %v399
    %1818 = vmatpush1.bf16.msra.mxu0 %v398
    %1819 = vmatprep.subr.bf16.mxu0 %v403
    %1820 = vmatpush1.bf16.msra.mxu0 %v402
    %1821 = vmatprep.subr.bf16.mxu0 0
    %1822 = vmatpush1.bf16.msra.mxu0 0
    %1823 = vmatprep.subr.bf16.mxu0 0
    %1824 = vmatpush1.bf16.msra.mxu0 0
    %1825 = vmatprep.subr.bf16.mxu0 0
    %1826 = vmatpush1.bf16.msra.mxu0 0
    %1827 = vmatprep.subr.bf16.mxu0 0
    %1828 = vmatpush1.bf16.msra.mxu0 0
    %1829 = vmatprep.subr.bf16.mxu0 0
    %1830 = vmatpush1.bf16.msra.mxu0 0
    %1831 = vmatprep.subr.bf16.mxu0 0
    %1832 = vmatpush1.bf16.msra.mxu0 0
    %1833 = vmatprep.subr.bf16.mxu0 0
    %1834 = vmatpush1.bf16.msra.mxu0 0
    %1835 = vmatprep.subr.bf16.mxu0 0
    %1836 = vmatpush1.bf16.msra.mxu0 0
    %1837 = vmatprep.subr.bf16.mxu0 0
    %1838 = vmatpush1.bf16.msra.mxu0 0
    %1839 = vmatprep.subr.bf16.mxu0 0
    %1840 = vmatpush1.bf16.msra.mxu0 0
    %1841 = vmatprep.subr.bf16.mxu0 0
    %1842 = vmatpush1.bf16.msra.mxu0 0
    %1843 = vmatprep.subr.bf16.mxu0 0
    %1844 = vmatpush1.bf16.msra.mxu0 0
    %1845 = vmatprep.subr.bf16.mxu0 0
    %1846 = vmatpush1.bf16.msra.mxu0 0
    %1847 = vmatprep.subr.bf16.mxu0 0
    %1848 = vmatpush1.bf16.msra.mxu0 0
    %1849 = vmatprep.mubr.bf16.mxu0 0
    %1850 = vmatmul.mubr.bf16.gmra.mrb[0].mxu0 %v1815
    %v1851 = vpop.f32.mrb[0].mxu0
    %v1852 = vadd.f32 %v1767, %v1851
    %v1853 = vpop.f32.mrb[0].mxu0
    %v1854 = vadd.f32 %v1769, %v1853
    %v1855 = vpop.f32.mrb[0].mxu0
    %v1856 = vpop.f32.mrb[0].mxu0
    %1857 = vdwg.mxu0
    %1858 = vmatprep.subr.bf16.mxu0 %v401
    %1859 = vmatpush1.bf16.msra.mxu0 %v400
    %1860 = vmatprep.subr.bf16.mxu0 %v405
    %1861 = vmatpush1.bf16.msra.mxu0 %v404
    %1862 = vmatprep.subr.bf16.mxu0 0
    %1863 = vmatpush1.bf16.msra.mxu0 0
    %1864 = vmatprep.subr.bf16.mxu0 0
    %1865 = vmatpush1.bf16.msra.mxu0 0
    %1866 = vmatprep.subr.bf16.mxu0 0
    %1867 = vmatpush1.bf16.msra.mxu0 0
    %1868 = vmatprep.subr.bf16.mxu0 0
    %1869 = vmatpush1.bf16.msra.mxu0 0
    %1870 = vmatprep.subr.bf16.mxu0 0
    %1871 = vmatpush1.bf16.msra.mxu0 0
    %1872 = vmatprep.subr.bf16.mxu0 0
    %1873 = vmatpush1.bf16.msra.mxu0 0
    %1874 = vmatprep.subr.bf16.mxu0 0
    %1875 = vmatpush1.bf16.msra.mxu0 0
    %1876 = vmatprep.subr.bf16.mxu0 0
    %1877 = vmatpush1.bf16.msra.mxu0 0
    %1878 = vmatprep.subr.bf16.mxu0 0
    %1879 = vmatpush1.bf16.msra.mxu0 0
    %1880 = vmatprep.subr.bf16.mxu0 0
    %1881 = vmatpush1.bf16.msra.mxu0 0
    %1882 = vmatprep.subr.bf16.mxu0 0
    %1883 = vmatpush1.bf16.msra.mxu0 0
    %1884 = vmatprep.subr.bf16.mxu0 0
    %1885 = vmatpush1.bf16.msra.mxu0 0
    %1886 = vmatprep.subr.bf16.mxu0 0
    %1887 = vmatpush1.bf16.msra.mxu0 0
    %1888 = vmatprep.subr.bf16.mxu0 0
    %1889 = vmatpush1.bf16.msra.mxu0 0
    %1890 = vmatprep.mubr.bf16.mxu0 0
    %1891 = vmatmul.mubr.bf16.gmra.mrb[0].mxu0 %v1815
    %v1892 = vpop.f32.mrb[0].mxu0
    %v1893 = vadd.f32 %v1808, %v1892
    %v1894 = vpop.f32.mrb[0].mxu0
    %v1895 = vadd.f32 %v1810, %v1894
    %v1896 = vpop.f32.mrb[0].mxu0
    %v1897 = vpop.f32.mrb[0].mxu0
    %1898 = vdwg.mxu0
    %v1899 = vadd.f32 %v1852, %v111
    %v1900 = vadd.f32 %v1854, %v115
    %v1901 = vadd.f32 %v1893, %v119
    %v1902 = vadd.f32 %v1895, %v123
    %v1903 = vxor.u32 %v1899, 2147483648
    %v1904 = vmul.f32 %v1903, 1.442695
    %v1905 = vpow.pop %v1904
    %v1906 = vadd.f32 %v1905, 1.0
    %v1907 = vrcp.pop %v1906
    %v1908 = vmul.f32 1.0, %v1907
    %v1909 = vxor.u32 %v1900, 2147483648
    %v1910 = vmul.f32 %v1909, 1.442695
    %v1911 = vpow.pop %v1910
    %v1912 = vadd.f32 %v1911, 1.0
    %v1913 = vrcp.pop %v1912
    %v1914 = vmul.f32 1.0, %v1913
    %v1915 = vtanh.pop %v1901
    %v1916 = vxor.u32 %v1902, 2147483648
    %v1917 = vmul.f32 %v1916, 1.442695
    %v1918 = vpow.pop %v1917
    %v1919 = vadd.f32 %v1918, 1.0
    %v1920 = vrcp.pop %v1919
    %v1921 = vmul.f32 1.0, %v1920
    %v1922 = vmul.f32 %v1914, %v1724
    %v1923 = vmul.f32 %v1908, %v1915
    %v1924 = vadd.f32 %v1922, %v1923
    %v1925 = vtanh.pop %v1924
    %v1926 = vmul.f32 %v1921, %v1925
    %v1927 = vpack.c.bf16 %v1926, %v1926
    %s1928 = scalar_lea.vmem [#allocation10], 28
    %1929 = vst [vmem:[%s1928] sm:$0xf] %v1927
    %1930 = vst [vmem:[#allocation2] sm:$0xff] %v1926
    %1931 = vst [vmem:[#allocation3] sm:$0xff] %v1924
    // Predicated region
    $region34: #{tpu_custom_call.1} parent=1 // pred_check
      _
    $region35: #{tpu_custom_call.1} parent=1 // pred_check_branch
      %1933 = sbr.rel (0) target = $region37
    $region36: #{tpu_custom_call.1} parent=1 // pred_region
      %s1935 = ssub.s32 512, 512
      %1936 = vsyncadd [#allocation6], %s1935
      %s1937 = sshll.u32 [#allocation10], 4
      %s1938 = int_to_ptr.vmem [resolvable:$true] %s1937
      %1943 = dma.vmem_to_hbm [thread:$0]  %s1938, 512, %s4, [#allocation6], 64, 64, 4
    $region37: #{tpu_custom_call.1} parent=1 // pred_fallthru
      _
    // Predicated region
    $region38: #{tpu_custom_call.1} parent=1 // pred_check
      _
    $region39: #{tpu_custom_call.1} parent=1 // pred_check_branch
      %1945 = sbr.rel (0) target = $region41
    $region40: #{tpu_custom_call.1} parent=1 // pred_region
      %1946 = dma.done [#allocation6], 512
    $region41: #{tpu_custom_call.1} parent=1 // pred_fallthru
      _
    %1947 = vsyncpa [#allocation5], 1
    %1948 = vsyncpa [#allocation8], 1
    %1949 = vsyncpa [#allocation6], 1

</llo_original>
